<compile_context>
chip_gen: v7x
topology: tpu7x:2x2x1
jax: 0.10.0
libtpu: 0.0.40
codegen_flags: <defaults>
</compile_context>

<pallas_src>
import functools

import jax
import jax.numpy as jnp
from jax import lax
from jax.experimental import pallas as pl
from jax.experimental.pallas import tpu as pltpu

EPS = 1e-5  # torch.nn.InstanceNorm1d default eps


# --------------------------------- kernel ---------------------------------- #
def _resblock_kernel(dilations, ksize,
                     x_ref, style_ref, chan_ref, w_ref, out_ref):
    C, T = x_ref.shape[1], x_ref.shape[2]
    half = (ksize - 1) // 2

    x = x_ref[0]             # [C, T] f32
    st = style_ref[0]        # [C, 4*n]  per-batch: (1+g1, be1, 1+g2, be2) / stage
    ch = chan_ref[...]       # [C, 6*n]  shared:   (b1, b2, a1, 1/a1, a2, 1/a2)
    t_idx = lax.broadcasted_iota(jnp.int32, (C, T), 1)

    def shift(v, off):
        # out[:, t] = v[:, t + off], zero outside [0, T)  (conv zero padding)
        if off == 0:
            return v
        rolled = pltpu.roll(v, (-off) % T, axis=1)          # XLU lane rotate
        mask = (t_idx >= -off) & (t_idx < T - off)
        return jnp.where(mask, rolled, 0.0)

    def conv(v, w, b, d):
        # kernel-size `ksize`, dilation `d`, 'same' padding -> one MXU matmul.
        taps = [shift(v, (k - half) * d) for k in range(ksize)]
        xs = jnp.concatenate(taps, axis=0).astype(jnp.bfloat16)   # [K*C, T]
        return jnp.dot(w, xs, preferred_element_type=jnp.float32) + b

    def adain(v, scale_g, beta):
        # Fused InstanceNorm1d (no affine) + AdaIN affine: one scale/shift FMA.
        mean = jnp.mean(v, axis=-1, keepdims=True)
        var = jnp.mean(v * v, axis=-1, keepdims=True) - mean * mean
        sc = scale_g * lax.rsqrt(var + EPS)
        return sc * v + (beta - sc * mean)

    def snake(v, a, inv_a):
        s = jnp.sin(a * v)
        return v + inv_a * (s * s)

    for i, d in enumerate(dilations):          # static 3-stage unroll
        c0, k0 = 4 * i, 6 * i
        g1p, be1 = st[:, c0:c0 + 1], st[:, c0 + 1:c0 + 2]
        g2p, be2 = st[:, c0 + 2:c0 + 3], st[:, c0 + 3:c0 + 4]
        b1, b2 = ch[:, k0:k0 + 1], ch[:, k0 + 1:k0 + 2]
        a1, ia1 = ch[:, k0 + 2:k0 + 3], ch[:, k0 + 3:k0 + 4]
        a2, ia2 = ch[:, k0 + 4:k0 + 5], ch[:, k0 + 5:k0 + 6]

        xt = adain(x, g1p, be1)
        xt = snake(xt, a1, ia1)
        xt = conv(xt, w_ref[2 * i], b1, d)       # dilated conv
        xt = adain(xt, g2p, be2)
        xt = snake(xt, a2, ia2)
        xt = conv(xt, w_ref[2 * i + 1], b2, 1)   # dilation-1 conv
        x = x + xt                               # residual

    out_ref[0] = x


# ------------------------------ module wrapper ------------------------------ #
def adain_resblock1_forward(x, s, params):
    """x: [B, C, T], s: [B, style_dim] -> [B, C, T] (AdaINResBlock1.forward)."""
    B, C, T = x.shape
    dil = tuple(int(d) for d in params["dilations"])
    n = len(dil)
    K = params["w1"][0].shape[-1]

    # Per-batch AdaIN projections (tiny Linear on s) packed -> [B, C, 4n].
    cols = []
    for i in range(n):
        h1 = s @ params["fc1_w"][i].T + params["fc1_b"][i]       # [B, 2C]
        g1, be1 = jnp.split(h1, 2, axis=-1)
        h2 = s @ params["fc2_w"][i].T + params["fc2_b"][i]
        g2, be2 = jnp.split(h2, 2, axis=-1)
        cols += [1.0 + g1, be1, 1.0 + g2, be2]
    style = jnp.stack(cols, axis=-1)                             # [B, C, 4n]

    # Shared per-channel params packed -> [C, 6n].
    ccols = []
    for i in range(n):
        a1, a2 = params["alpha1"][i], params["alpha2"][i]
        ccols += [params["b1"][i], params["b2"][i], a1, 1.0 / a1, a2, 1.0 / a2]
    chan = jnp.stack(ccols, axis=-1)                             # [C, 6n]

    # Conv weights [Cout, Cin, K] -> [Cout, K*Cin], stacked over the 6 convs.
    ws = []
    for i in range(n):
        ws.append(jnp.transpose(params["w1"][i], (0, 2, 1)).reshape(C, K * C))
        ws.append(jnp.transpose(params["w2"][i], (0, 2, 1)).reshape(C, K * C))
    w_all = jnp.stack(ws, axis=0).astype(jnp.bfloat16)           # [2n, C, K*C]

    kernel = functools.partial(_resblock_kernel, dil, K)
    xspec = pl.BlockSpec((1, C, T), lambda b: (b, 0, 0))

    return pl.pallas_call(
        kernel,
        out_shape=jax.ShapeDtypeStruct((B, C, T), x.dtype),
        grid=(B,),
        in_specs=[
            xspec,
            pl.BlockSpec((1, C, 4 * n), lambda b: (b, 0, 0)),
            pl.BlockSpec((C, 6 * n), lambda b: (0, 0)),
            pl.BlockSpec((2 * n, C, K * C), lambda b: (0, 0, 0)),
        ],
        out_specs=xspec,
        compiler_params=pltpu.CompilerParams(
            dimension_semantics=("parallel",)),
    )(x, style, chan, w_all)


# ------------------------------ pure-JAX reference -------------------------- #
def _instance_norm_ref(x):
    mean = jnp.mean(x, axis=-1, keepdims=True)
    var = jnp.mean((x - mean) ** 2, axis=-1, keepdims=True)
    return (x - mean) * lax.rsqrt(var + EPS)


def _conv1d_ref(x, w, b, d):
    # Same bf16 operands / f32 accumulation as the kernel's MXU matmul.
    p = d * (w.shape[-1] - 1) // 2
    out = lax.conv_general_dilated(
        x.astype(jnp.bfloat16), w.astype(jnp.bfloat16),
        window_strides=(1,), padding=[(p, p)], rhs_dilation=(d,),
        dimension_numbers=("NCH", "OIH", "NCH"),
        preferred_element_type=jnp.float32)
    return out + b[None, :, None]


def adain_resblock1_ref(x, s, params):
    for i, d in enumerate(params["dilations"]):
        h1 = s @ params["fc1_w"][i].T + params["fc1_b"][i]
        g1, be1 = jnp.split(h1, 2, axis=-1)
        h2 = s @ params["fc2_w"][i].T + params["fc2_b"][i]
        g2, be2 = jnp.split(h2, 2, axis=-1)
        a1 = params["alpha1"][i][None, :, None]
        a2 = params["alpha2"][i][None, :, None]

        xt = (1.0 + g1[..., None]) * _instance_norm_ref(x) + be1[..., None]
        xt = xt + (1.0 / a1) * jnp.sin(a1 * xt) ** 2
        xt = _conv1d_ref(xt, params["w1"][i], params["b1"][i], d)
        xt = (1.0 + g2[..., None]) * _instance_norm_ref(xt) + be2[..., None]
        xt = xt + (1.0 / a2) * jnp.sin(a2 * xt) ** 2
        xt = _conv1d_ref(xt, params["w2"][i], params["b2"][i], 1)
        x = xt + x
    return x


# ----------------------------------- main ----------------------------------- #
if __name__ == "__main__":
    # Small but lane-dense shapes: C multiple of 8 (sublanes), T multiple of 128.
    B, C, T, SD, K = 2, 16, 128, 64, 3
    dilations = (1, 3, 5)

    key = jax.random.PRNGKey(0)
    keys = iter(jax.random.split(key, 64))

    def nrm(shape, std):
        return std * jax.random.normal(next(keys), shape, dtype=jnp.float32)

    params = {
        "dilations": dilations,
        # convs1 / convs2: weight ~ N(0, 0.01) (init_weights), small biases
        "w1": [nrm((C, C, K), 0.01) for _ in dilations],
        "b1": [nrm((C,), 0.01) for _ in dilations],
        "w2": [nrm((C, C, K), 0.01) for _ in dilations],
        "b2": [nrm((C,), 0.01) for _ in dilations],
        # AdaIN fc layers: Linear(style_dim -> 2*channels)
        "fc1_w": [nrm((2 * C, SD), 0.1) for _ in dilations],
        "fc1_b": [nrm((2 * C,), 0.1) for _ in dilations],
        "fc2_w": [nrm((2 * C, SD), 0.1) for _ in dilations],
        "fc2_b": [nrm((2 * C,), 0.1) for _ in dilations],
        # alpha parameters initialized to ones (as in the module)
        "alpha1": [jnp.ones((C,), jnp.float32) for _ in dilations],
        "alpha2": [jnp.ones((C,), jnp.float32) for _ in dilations],
    }

    x = jax.random.normal(next(keys), (B, C, T), dtype=jnp.float32)
    s = jax.random.normal(next(keys), (B, SD), dtype=jnp.float32)

    out = jax.block_until_ready(adain_resblock1_forward(x, s, params))
    ref = jax.block_until_ready(adain_resblock1_ref(x, s, params))

    assert out.shape == (B, C, T)
    # Tolerance reflects bf16 MXU operands (same rounding on both sides; residual
    # differences come from fp32 accumulation order / transcendental lowering,
    # amplified by the instance-norm rescale).
    max_diff = jnp.max(jnp.abs(out - ref))
    assert jnp.allclose(out, ref, rtol=2e-3, atol=2e-3), f"max abs diff {max_diff}"
    print("KERNEL_OK")
</pallas_src>

<mosaic_0001>
module attributes {stable_mosaic.version = 11 : i64} {
  func.func @_resblock_kernel(%arg0: i32, %arg1: memref<1x16x128xf32, #tpu.memory_space<vmem>>, %arg2: memref<1x16x12xf32, #tpu.memory_space<vmem>>, %arg3: memref<16x18xf32, #tpu.memory_space<vmem>>, %arg4: memref<6x16x48xbf16, #tpu.memory_space<vmem>>, %arg5: memref<1x16x128xf32, #tpu.memory_space<vmem>>) attributes {dimension_semantics = [#tpu.dimension_semantics<parallel>], iteration_bounds = array<i64: 2>, scalar_prefetch = 0 : i64, scratch_operands = 0 : i64, tpu.core_type = #tpu.core_type<tc>, window_params = [{transform_indices = @transform_0, window_bounds = array<i64: 1, 16, 128>}, {transform_indices = @transform_1, window_bounds = array<i64: 1, 16, 12>}, {pipeline_mode = #tpu.pipeline_mode<synchronous>, transform_indices = @transform_2, window_bounds = array<i64: 16, 18>}, {pipeline_mode = #tpu.pipeline_mode<synchronous>, transform_indices = @transform_3, window_bounds = array<i64: 6, 16, 48>}, {transform_indices = @transform_4, window_bounds = array<i64: 1, 16, 128>}]} {
    %c0 = arith.constant 0 : index
    %c0_0 = arith.constant 0 : index
    %c0_1 = arith.constant 0 : index
    %0 = vector.load %arg1[%c0, %c0_0, %c0_1] : memref<1x16x128xf32, #tpu.memory_space<vmem>>, vector<1x16x128xf32>
    %1 = vector.shape_cast %0 : vector<1x16x128xf32> to vector<16x128xf32>
    %c0_2 = arith.constant 0 : index
    %c0_3 = arith.constant 0 : index
    %c0_4 = arith.constant 0 : index
    %2 = vector.load %arg2[%c0_2, %c0_3, %c0_4] : memref<1x16x12xf32, #tpu.memory_space<vmem>>, vector<1x16x12xf32>
    %3 = vector.shape_cast %2 : vector<1x16x12xf32> to vector<16x12xf32>
    %c0_5 = arith.constant 0 : index
    %c0_6 = arith.constant 0 : index
    %4 = vector.load %arg3[%c0_5, %c0_6] : memref<16x18xf32, #tpu.memory_space<vmem>>, vector<16x18xf32>
    %5 = tpu.iota {dimensions = array<i32: 1>} : vector<16x128xi32>
    %6 = vector.extract_strided_slice %3 {offsets = [0, 0], sizes = [16, 1], strides = [1, 1]} : vector<16x12xf32> to vector<16x1xf32>
    %7 = vector.extract_strided_slice %3 {offsets = [0, 1], sizes = [16, 1], strides = [1, 1]} : vector<16x12xf32> to vector<16x1xf32>
    %8 = vector.extract_strided_slice %3 {offsets = [0, 2], sizes = [16, 1], strides = [1, 1]} : vector<16x12xf32> to vector<16x1xf32>
    %9 = vector.extract_strided_slice %3 {offsets = [0, 3], sizes = [16, 1], strides = [1, 1]} : vector<16x12xf32> to vector<16x1xf32>
    %10 = vector.extract_strided_slice %4 {offsets = [0, 0], sizes = [16, 1], strides = [1, 1]} : vector<16x18xf32> to vector<16x1xf32>
    %11 = vector.extract_strided_slice %4 {offsets = [0, 1], sizes = [16, 1], strides = [1, 1]} : vector<16x18xf32> to vector<16x1xf32>
    %12 = vector.extract_strided_slice %4 {offsets = [0, 2], sizes = [16, 1], strides = [1, 1]} : vector<16x18xf32> to vector<16x1xf32>
    %13 = vector.extract_strided_slice %4 {offsets = [0, 3], sizes = [16, 1], strides = [1, 1]} : vector<16x18xf32> to vector<16x1xf32>
    %14 = vector.extract_strided_slice %4 {offsets = [0, 4], sizes = [16, 1], strides = [1, 1]} : vector<16x18xf32> to vector<16x1xf32>
    %15 = vector.extract_strided_slice %4 {offsets = [0, 5], sizes = [16, 1], strides = [1, 1]} : vector<16x18xf32> to vector<16x1xf32>
    %cst = arith.constant dense<0.000000e+00> : vector<16xf32>
    %16 = vector.multi_reduction <add>, %1, %cst [1] : vector<16x128xf32> to vector<16xf32>
    %17 = vector.shape_cast %16 : vector<16xf32> to vector<16x1xf32>
    %cst_7 = arith.constant 1.280000e+02 : f32
    %18 = vector.broadcast %cst_7 : f32 to vector<16x1xf32>
    %19 = arith.divf %17, %18 : vector<16x1xf32>
    %20 = arith.mulf %1, %1 : vector<16x128xf32>
    %cst_8 = arith.constant dense<0.000000e+00> : vector<16xf32>
    %21 = vector.multi_reduction <add>, %20, %cst_8 [1] : vector<16x128xf32> to vector<16xf32>
    %22 = vector.shape_cast %21 : vector<16xf32> to vector<16x1xf32>
    %cst_9 = arith.constant 1.280000e+02 : f32
    %23 = vector.broadcast %cst_9 : f32 to vector<16x1xf32>
    %24 = arith.divf %22, %23 : vector<16x1xf32>
    %25 = arith.mulf %19, %19 : vector<16x1xf32>
    %26 = arith.subf %24, %25 : vector<16x1xf32>
    %cst_10 = arith.constant 9.99999974E-6 : f32
    %27 = vector.broadcast %cst_10 : f32 to vector<16x1xf32>
    %28 = arith.addf %26, %27 : vector<16x1xf32>
    %29 = math.rsqrt %28 : vector<16x1xf32>
    %30 = arith.mulf %6, %29 : vector<16x1xf32>
    %31 = vector.broadcast %30 : vector<16x1xf32> to vector<16x128xf32>
    %32 = arith.mulf %31, %1 : vector<16x128xf32>
    %33 = arith.mulf %30, %19 : vector<16x1xf32>
    %34 = arith.subf %7, %33 : vector<16x1xf32>
    %35 = vector.broadcast %34 : vector<16x1xf32> to vector<16x128xf32>
    %36 = arith.addf %32, %35 : vector<16x128xf32>
    %37 = vector.broadcast %12 : vector<16x1xf32> to vector<16x128xf32>
    %38 = arith.mulf %37, %36 : vector<16x128xf32>
    %39 = math.sin %38 : vector<16x128xf32>
    %40 = arith.mulf %39, %39 : vector<16x128xf32>
    %41 = vector.broadcast %13 : vector<16x1xf32> to vector<16x128xf32>
    %42 = arith.mulf %41, %40 : vector<16x128xf32>
    %43 = arith.addf %36, %42 : vector<16x128xf32>
    %c0_11 = arith.constant 0 : index
    %c0_12 = arith.constant 0 : index
    %c0_13 = arith.constant 0 : index
    %44 = vector.load %arg4[%c0_11, %c0_12, %c0_13] : memref<6x16x48xbf16, #tpu.memory_space<vmem>>, vector<1x16x48xbf16>
    %45 = vector.shape_cast %44 : vector<1x16x48xbf16> to vector<16x48xbf16>
    %c1_i32 = arith.constant 1 : i32
    %46 = tpu.dynamic_rotate %43 by %c1_i32 dim 1 : vector<16x128xf32>, i32 -> vector<16x128xf32>
    %c1_i32_14 = arith.constant 1 : i32
    %47 = vector.broadcast %c1_i32_14 : i32 to vector<16x128xi32>
    %48 = arith.cmpi sge, %5, %47 : vector<16x128xi32>
    %c129_i32 = arith.constant 129 : i32
    %49 = vector.broadcast %c129_i32 : i32 to vector<16x128xi32>
    %50 = arith.cmpi slt, %5, %49 : vector<16x128xi32>
    %51 = arith.andi %48, %50 : vector<16x128xi1>
    %cst_15 = arith.constant 0.000000e+00 : f32
    %52 = vector.broadcast %cst_15 : f32 to vector<16x128xf32>
    %53 = arith.select %51, %46, %52 : vector<16x128xi1>, vector<16x128xf32>
    %c127_i32 = arith.constant 127 : i32
    %54 = tpu.dynamic_rotate %43 by %c127_i32 dim 1 : vector<16x128xf32>, i32 -> vector<16x128xf32>
    %c-1_i32 = arith.constant -1 : i32
    %55 = vector.broadcast %c-1_i32 : i32 to vector<16x128xi32>
    %56 = arith.cmpi sge, %5, %55 : vector<16x128xi32>
    %c127_i32_16 = arith.constant 127 : i32
    %57 = vector.broadcast %c127_i32_16 : i32 to vector<16x128xi32>
    %58 = arith.cmpi slt, %5, %57 : vector<16x128xi32>
    %59 = arith.andi %56, %58 : vector<16x128xi1>
    %cst_17 = arith.constant 0.000000e+00 : f32
    %60 = vector.broadcast %cst_17 : f32 to vector<16x128xf32>
    %61 = arith.select %59, %54, %60 : vector<16x128xi1>, vector<16x128xf32>
    %62 = tpu.concatenate %53, %43, %61 in 0 : vector<16x128xf32>, vector<16x128xf32>, vector<16x128xf32> -> vector<48x128xf32>
    %63 = arith.truncf %62 : vector<48x128xf32> to vector<48x128xbf16>
    %cst_18 = arith.constant dense<0.000000e+00> : vector<16x128xf32>
    %64 = tpu.matmul %45, %63, %cst_18 {dimension_numbers = #tpu.dot_dimension_numbers<[1], [0], [0], [1], [0, 0, 1, 1], [], []>} : vector<16x48xbf16>, vector<48x128xbf16>, vector<16x128xf32> -> vector<16x128xf32>
    %65 = vector.broadcast %10 : vector<16x1xf32> to vector<16x128xf32>
    %66 = arith.addf %64, %65 : vector<16x128xf32>
    %cst_19 = arith.constant dense<0.000000e+00> : vector<16xf32>
    %67 = vector.multi_reduction <add>, %66, %cst_19 [1] : vector<16x128xf32> to vector<16xf32>
    %68 = vector.shape_cast %67 : vector<16xf32> to vector<16x1xf32>
    %cst_20 = arith.constant 1.280000e+02 : f32
    %69 = vector.broadcast %cst_20 : f32 to vector<16x1xf32>
    %70 = arith.divf %68, %69 : vector<16x1xf32>
    %71 = arith.mulf %66, %66 : vector<16x128xf32>
    %cst_21 = arith.constant dense<0.000000e+00> : vector<16xf32>
    %72 = vector.multi_reduction <add>, %71, %cst_21 [1] : vector<16x128xf32> to vector<16xf32>
    %73 = vector.shape_cast %72 : vector<16xf32> to vector<16x1xf32>
    %cst_22 = arith.constant 1.280000e+02 : f32
    %74 = vector.broadcast %cst_22 : f32 to vector<16x1xf32>
    %75 = arith.divf %73, %74 : vector<16x1xf32>
    %76 = arith.mulf %70, %70 : vector<16x1xf32>
    %77 = arith.subf %75, %76 : vector<16x1xf32>
    %cst_23 = arith.constant 9.99999974E-6 : f32
    %78 = vector.broadcast %cst_23 : f32 to vector<16x1xf32>
    %79 = arith.addf %77, %78 : vector<16x1xf32>
    %80 = math.rsqrt %79 : vector<16x1xf32>
    %81 = arith.mulf %8, %80 : vector<16x1xf32>
    %82 = vector.broadcast %81 : vector<16x1xf32> to vector<16x128xf32>
    %83 = arith.mulf %82, %66 : vector<16x128xf32>
    %84 = arith.mulf %81, %70 : vector<16x1xf32>
    %85 = arith.subf %9, %84 : vector<16x1xf32>
    %86 = vector.broadcast %85 : vector<16x1xf32> to vector<16x128xf32>
    %87 = arith.addf %83, %86 : vector<16x128xf32>
    %88 = vector.broadcast %14 : vector<16x1xf32> to vector<16x128xf32>
    %89 = arith.mulf %88, %87 : vector<16x128xf32>
    %90 = math.sin %89 : vector<16x128xf32>
    %91 = arith.mulf %90, %90 : vector<16x128xf32>
    %92 = vector.broadcast %15 : vector<16x1xf32> to vector<16x128xf32>
    %93 = arith.mulf %92, %91 : vector<16x128xf32>
    %94 = arith.addf %87, %93 : vector<16x128xf32>
    %c1 = arith.constant 1 : index
    %c0_24 = arith.constant 0 : index
    %c0_25 = arith.constant 0 : index
    %95 = vector.load %arg4[%c1, %c0_24, %c0_25] : memref<6x16x48xbf16, #tpu.memory_space<vmem>>, vector<1x16x48xbf16>
    %96 = vector.shape_cast %95 : vector<1x16x48xbf16> to vector<16x48xbf16>
    %c1_i32_26 = arith.constant 1 : i32
    %97 = tpu.dynamic_rotate %94 by %c1_i32_26 dim 1 : vector<16x128xf32>, i32 -> vector<16x128xf32>
    %c1_i32_27 = arith.constant 1 : i32
    %98 = vector.broadcast %c1_i32_27 : i32 to vector<16x128xi32>
    %99 = arith.cmpi sge, %5, %98 : vector<16x128xi32>
    %c129_i32_28 = arith.constant 129 : i32
    %100 = vector.broadcast %c129_i32_28 : i32 to vector<16x128xi32>
    %101 = arith.cmpi slt, %5, %100 : vector<16x128xi32>
    %102 = arith.andi %99, %101 : vector<16x128xi1>
    %cst_29 = arith.constant 0.000000e+00 : f32
    %103 = vector.broadcast %cst_29 : f32 to vector<16x128xf32>
    %104 = arith.select %102, %97, %103 : vector<16x128xi1>, vector<16x128xf32>
    %c127_i32_30 = arith.constant 127 : i32
    %105 = tpu.dynamic_rotate %94 by %c127_i32_30 dim 1 : vector<16x128xf32>, i32 -> vector<16x128xf32>
    %c-1_i32_31 = arith.constant -1 : i32
    %106 = vector.broadcast %c-1_i32_31 : i32 to vector<16x128xi32>
    %107 = arith.cmpi sge, %5, %106 : vector<16x128xi32>
    %c127_i32_32 = arith.constant 127 : i32
    %108 = vector.broadcast %c127_i32_32 : i32 to vector<16x128xi32>
    %109 = arith.cmpi slt, %5, %108 : vector<16x128xi32>
    %110 = arith.andi %107, %109 : vector<16x128xi1>
    %cst_33 = arith.constant 0.000000e+00 : f32
    %111 = vector.broadcast %cst_33 : f32 to vector<16x128xf32>
    %112 = arith.select %110, %105, %111 : vector<16x128xi1>, vector<16x128xf32>
    %113 = tpu.concatenate %104, %94, %112 in 0 : vector<16x128xf32>, vector<16x128xf32>, vector<16x128xf32> -> vector<48x128xf32>
    %114 = arith.truncf %113 : vector<48x128xf32> to vector<48x128xbf16>
    %cst_34 = arith.constant dense<0.000000e+00> : vector<16x128xf32>
    %115 = tpu.matmul %96, %114, %cst_34 {dimension_numbers = #tpu.dot_dimension_numbers<[1], [0], [0], [1], [0, 0, 1, 1], [], []>} : vector<16x48xbf16>, vector<48x128xbf16>, vector<16x128xf32> -> vector<16x128xf32>
    %116 = vector.broadcast %11 : vector<16x1xf32> to vector<16x128xf32>
    %117 = arith.addf %115, %116 : vector<16x128xf32>
    %118 = arith.addf %1, %117 : vector<16x128xf32>
    %119 = vector.extract_strided_slice %3 {offsets = [0, 4], sizes = [16, 1], strides = [1, 1]} : vector<16x12xf32> to vector<16x1xf32>
    %120 = vector.extract_strided_slice %3 {offsets = [0, 5], sizes = [16, 1], strides = [1, 1]} : vector<16x12xf32> to vector<16x1xf32>
    %121 = vector.extract_strided_slice %3 {offsets = [0, 6], sizes = [16, 1], strides = [1, 1]} : vector<16x12xf32> to vector<16x1xf32>
    %122 = vector.extract_strided_slice %3 {offsets = [0, 7], sizes = [16, 1], strides = [1, 1]} : vector<16x12xf32> to vector<16x1xf32>
    %123 = vector.extract_strided_slice %4 {offsets = [0, 6], sizes = [16, 1], strides = [1, 1]} : vector<16x18xf32> to vector<16x1xf32>
    %124 = vector.extract_strided_slice %4 {offsets = [0, 7], sizes = [16, 1], strides = [1, 1]} : vector<16x18xf32> to vector<16x1xf32>
    %125 = vector.extract_strided_slice %4 {offsets = [0, 8], sizes = [16, 1], strides = [1, 1]} : vector<16x18xf32> to vector<16x1xf32>
    %126 = vector.extract_strided_slice %4 {offsets = [0, 9], sizes = [16, 1], strides = [1, 1]} : vector<16x18xf32> to vector<16x1xf32>
    %127 = vector.extract_strided_slice %4 {offsets = [0, 10], sizes = [16, 1], strides = [1, 1]} : vector<16x18xf32> to vector<16x1xf32>
    %128 = vector.extract_strided_slice %4 {offsets = [0, 11], sizes = [16, 1], strides = [1, 1]} : vector<16x18xf32> to vector<16x1xf32>
    %cst_35 = arith.constant dense<0.000000e+00> : vector<16xf32>
    %129 = vector.multi_reduction <add>, %118, %cst_35 [1] : vector<16x128xf32> to vector<16xf32>
    %130 = vector.shape_cast %129 : vector<16xf32> to vector<16x1xf32>
    %cst_36 = arith.constant 1.280000e+02 : f32
    %131 = vector.broadcast %cst_36 : f32 to vector<16x1xf32>
    %132 = arith.divf %130, %131 : vector<16x1xf32>
    %133 = arith.mulf %118, %118 : vector<16x128xf32>
    %cst_37 = arith.constant dense<0.000000e+00> : vector<16xf32>
    %134 = vector.multi_reduction <add>, %133, %cst_37 [1] : vector<16x128xf32> to vector<16xf32>
    %135 = vector.shape_cast %134 : vector<16xf32> to vector<16x1xf32>
    %cst_38 = arith.constant 1.280000e+02 : f32
    %136 = vector.broadcast %cst_38 : f32 to vector<16x1xf32>
    %137 = arith.divf %135, %136 : vector<16x1xf32>
    %138 = arith.mulf %132, %132 : vector<16x1xf32>
    %139 = arith.subf %137, %138 : vector<16x1xf32>
    %cst_39 = arith.constant 9.99999974E-6 : f32
    %140 = vector.broadcast %cst_39 : f32 to vector<16x1xf32>
    %141 = arith.addf %139, %140 : vector<16x1xf32>
    %142 = math.rsqrt %141 : vector<16x1xf32>
    %143 = arith.mulf %119, %142 : vector<16x1xf32>
    %144 = vector.broadcast %143 : vector<16x1xf32> to vector<16x128xf32>
    %145 = arith.mulf %144, %118 : vector<16x128xf32>
    %146 = arith.mulf %143, %132 : vector<16x1xf32>
    %147 = arith.subf %120, %146 : vector<16x1xf32>
    %148 = vector.broadcast %147 : vector<16x1xf32> to vector<16x128xf32>
    %149 = arith.addf %145, %148 : vector<16x128xf32>
    %150 = vector.broadcast %125 : vector<16x1xf32> to vector<16x128xf32>
    %151 = arith.mulf %150, %149 : vector<16x128xf32>
    %152 = math.sin %151 : vector<16x128xf32>
    %153 = arith.mulf %152, %152 : vector<16x128xf32>
    %154 = vector.broadcast %126 : vector<16x1xf32> to vector<16x128xf32>
    %155 = arith.mulf %154, %153 : vector<16x128xf32>
    %156 = arith.addf %149, %155 : vector<16x128xf32>
    %c2 = arith.constant 2 : index
    %c0_40 = arith.constant 0 : index
    %c0_41 = arith.constant 0 : index
    %157 = vector.load %arg4[%c2, %c0_40, %c0_41] : memref<6x16x48xbf16, #tpu.memory_space<vmem>>, vector<1x16x48xbf16>
    %158 = vector.shape_cast %157 : vector<1x16x48xbf16> to vector<16x48xbf16>
    %c3_i32 = arith.constant 3 : i32
    %159 = tpu.dynamic_rotate %156 by %c3_i32 dim 1 : vector<16x128xf32>, i32 -> vector<16x128xf32>
    %c3_i32_42 = arith.constant 3 : i32
    %160 = vector.broadcast %c3_i32_42 : i32 to vector<16x128xi32>
    %161 = arith.cmpi sge, %5, %160 : vector<16x128xi32>
    %c131_i32 = arith.constant 131 : i32
    %162 = vector.broadcast %c131_i32 : i32 to vector<16x128xi32>
    %163 = arith.cmpi slt, %5, %162 : vector<16x128xi32>
    %164 = arith.andi %161, %163 : vector<16x128xi1>
    %cst_43 = arith.constant 0.000000e+00 : f32
    %165 = vector.broadcast %cst_43 : f32 to vector<16x128xf32>
    %166 = arith.select %164, %159, %165 : vector<16x128xi1>, vector<16x128xf32>
    %c125_i32 = arith.constant 125 : i32
    %167 = tpu.dynamic_rotate %156 by %c125_i32 dim 1 : vector<16x128xf32>, i32 -> vector<16x128xf32>
    %c-3_i32 = arith.constant -3 : i32
    %168 = vector.broadcast %c-3_i32 : i32 to vector<16x128xi32>
    %169 = arith.cmpi sge, %5, %168 : vector<16x128xi32>
    %c125_i32_44 = arith.constant 125 : i32
    %170 = vector.broadcast %c125_i32_44 : i32 to vector<16x128xi32>
    %171 = arith.cmpi slt, %5, %170 : vector<16x128xi32>
    %172 = arith.andi %169, %171 : vector<16x128xi1>
    %cst_45 = arith.constant 0.000000e+00 : f32
    %173 = vector.broadcast %cst_45 : f32 to vector<16x128xf32>
    %174 = arith.select %172, %167, %173 : vector<16x128xi1>, vector<16x128xf32>
    %175 = tpu.concatenate %166, %156, %174 in 0 : vector<16x128xf32>, vector<16x128xf32>, vector<16x128xf32> -> vector<48x128xf32>
    %176 = arith.truncf %175 : vector<48x128xf32> to vector<48x128xbf16>
    %cst_46 = arith.constant dense<0.000000e+00> : vector<16x128xf32>
    %177 = tpu.matmul %158, %176, %cst_46 {dimension_numbers = #tpu.dot_dimension_numbers<[1], [0], [0], [1], [0, 0, 1, 1], [], []>} : vector<16x48xbf16>, vector<48x128xbf16>, vector<16x128xf32> -> vector<16x128xf32>
    %178 = vector.broadcast %123 : vector<16x1xf32> to vector<16x128xf32>
    %179 = arith.addf %177, %178 : vector<16x128xf32>
    %cst_47 = arith.constant dense<0.000000e+00> : vector<16xf32>
    %180 = vector.multi_reduction <add>, %179, %cst_47 [1] : vector<16x128xf32> to vector<16xf32>
    %181 = vector.shape_cast %180 : vector<16xf32> to vector<16x1xf32>
    %cst_48 = arith.constant 1.280000e+02 : f32
    %182 = vector.broadcast %cst_48 : f32 to vector<16x1xf32>
    %183 = arith.divf %181, %182 : vector<16x1xf32>
    %184 = arith.mulf %179, %179 : vector<16x128xf32>
    %cst_49 = arith.constant dense<0.000000e+00> : vector<16xf32>
    %185 = vector.multi_reduction <add>, %184, %cst_49 [1] : vector<16x128xf32> to vector<16xf32>
    %186 = vector.shape_cast %185 : vector<16xf32> to vector<16x1xf32>
    %cst_50 = arith.constant 1.280000e+02 : f32
    %187 = vector.broadcast %cst_50 : f32 to vector<16x1xf32>
    %188 = arith.divf %186, %187 : vector<16x1xf32>
    %189 = arith.mulf %183, %183 : vector<16x1xf32>
    %190 = arith.subf %188, %189 : vector<16x1xf32>
    %cst_51 = arith.constant 9.99999974E-6 : f32
    %191 = vector.broadcast %cst_51 : f32 to vector<16x1xf32>
    %192 = arith.addf %190, %191 : vector<16x1xf32>
    %193 = math.rsqrt %192 : vector<16x1xf32>
    %194 = arith.mulf %121, %193 : vector<16x1xf32>
    %195 = vector.broadcast %194 : vector<16x1xf32> to vector<16x128xf32>
    %196 = arith.mulf %195, %179 : vector<16x128xf32>
    %197 = arith.mulf %194, %183 : vector<16x1xf32>
    %198 = arith.subf %122, %197 : vector<16x1xf32>
    %199 = vector.broadcast %198 : vector<16x1xf32> to vector<16x128xf32>
    %200 = arith.addf %196, %199 : vector<16x128xf32>
    %201 = vector.broadcast %127 : vector<16x1xf32> to vector<16x128xf32>
    %202 = arith.mulf %201, %200 : vector<16x128xf32>
    %203 = math.sin %202 : vector<16x128xf32>
    %204 = arith.mulf %203, %203 : vector<16x128xf32>
    %205 = vector.broadcast %128 : vector<16x1xf32> to vector<16x128xf32>
    %206 = arith.mulf %205, %204 : vector<16x128xf32>
    %207 = arith.addf %200, %206 : vector<16x128xf32>
    %c3 = arith.constant 3 : index
    %c0_52 = arith.constant 0 : index
    %c0_53 = arith.constant 0 : index
    %208 = vector.load %arg4[%c3, %c0_52, %c0_53] : memref<6x16x48xbf16, #tpu.memory_space<vmem>>, vector<1x16x48xbf16>
    %209 = vector.shape_cast %208 : vector<1x16x48xbf16> to vector<16x48xbf16>
    %c1_i32_54 = arith.constant 1 : i32
    %210 = tpu.dynamic_rotate %207 by %c1_i32_54 dim 1 : vector<16x128xf32>, i32 -> vector<16x128xf32>
    %c1_i32_55 = arith.constant 1 : i32
    %211 = vector.broadcast %c1_i32_55 : i32 to vector<16x128xi32>
    %212 = arith.cmpi sge, %5, %211 : vector<16x128xi32>
    %c129_i32_56 = arith.constant 129 : i32
    %213 = vector.broadcast %c129_i32_56 : i32 to vector<16x128xi32>
    %214 = arith.cmpi slt, %5, %213 : vector<16x128xi32>
    %215 = arith.andi %212, %214 : vector<16x128xi1>
    %cst_57 = arith.constant 0.000000e+00 : f32
    %216 = vector.broadcast %cst_57 : f32 to vector<16x128xf32>
    %217 = arith.select %215, %210, %216 : vector<16x128xi1>, vector<16x128xf32>
    %c127_i32_58 = arith.constant 127 : i32
    %218 = tpu.dynamic_rotate %207 by %c127_i32_58 dim 1 : vector<16x128xf32>, i32 -> vector<16x128xf32>
    %c-1_i32_59 = arith.constant -1 : i32
    %219 = vector.broadcast %c-1_i32_59 : i32 to vector<16x128xi32>
    %220 = arith.cmpi sge, %5, %219 : vector<16x128xi32>
    %c127_i32_60 = arith.constant 127 : i32
    %221 = vector.broadcast %c127_i32_60 : i32 to vector<16x128xi32>
    %222 = arith.cmpi slt, %5, %221 : vector<16x128xi32>
    %223 = arith.andi %220, %222 : vector<16x128xi1>
    %cst_61 = arith.constant 0.000000e+00 : f32
    %224 = vector.broadcast %cst_61 : f32 to vector<16x128xf32>
    %225 = arith.select %223, %218, %224 : vector<16x128xi1>, vector<16x128xf32>
    %226 = tpu.concatenate %217, %207, %225 in 0 : vector<16x128xf32>, vector<16x128xf32>, vector<16x128xf32> -> vector<48x128xf32>
    %227 = arith.truncf %226 : vector<48x128xf32> to vector<48x128xbf16>
    %cst_62 = arith.constant dense<0.000000e+00> : vector<16x128xf32>
    %228 = tpu.matmul %209, %227, %cst_62 {dimension_numbers = #tpu.dot_dimension_numbers<[1], [0], [0], [1], [0, 0, 1, 1], [], []>} : vector<16x48xbf16>, vector<48x128xbf16>, vector<16x128xf32> -> vector<16x128xf32>
    %229 = vector.broadcast %124 : vector<16x1xf32> to vector<16x128xf32>
    %230 = arith.addf %228, %229 : vector<16x128xf32>
    %231 = arith.addf %118, %230 : vector<16x128xf32>
    %232 = vector.extract_strided_slice %3 {offsets = [0, 8], sizes = [16, 1], strides = [1, 1]} : vector<16x12xf32> to vector<16x1xf32>
    %233 = vector.extract_strided_slice %3 {offsets = [0, 9], sizes = [16, 1], strides = [1, 1]} : vector<16x12xf32> to vector<16x1xf32>
    %234 = vector.extract_strided_slice %3 {offsets = [0, 10], sizes = [16, 1], strides = [1, 1]} : vector<16x12xf32> to vector<16x1xf32>
    %235 = vector.extract_strided_slice %3 {offsets = [0, 11], sizes = [16, 1], strides = [1, 1]} : vector<16x12xf32> to vector<16x1xf32>
    %236 = vector.extract_strided_slice %4 {offsets = [0, 12], sizes = [16, 1], strides = [1, 1]} : vector<16x18xf32> to vector<16x1xf32>
    %237 = vector.extract_strided_slice %4 {offsets = [0, 13], sizes = [16, 1], strides = [1, 1]} : vector<16x18xf32> to vector<16x1xf32>
    %238 = vector.extract_strided_slice %4 {offsets = [0, 14], sizes = [16, 1], strides = [1, 1]} : vector<16x18xf32> to vector<16x1xf32>
    %239 = vector.extract_strided_slice %4 {offsets = [0, 15], sizes = [16, 1], strides = [1, 1]} : vector<16x18xf32> to vector<16x1xf32>
    %240 = vector.extract_strided_slice %4 {offsets = [0, 16], sizes = [16, 1], strides = [1, 1]} : vector<16x18xf32> to vector<16x1xf32>
    %241 = vector.extract_strided_slice %4 {offsets = [0, 17], sizes = [16, 1], strides = [1, 1]} : vector<16x18xf32> to vector<16x1xf32>
    %cst_63 = arith.constant dense<0.000000e+00> : vector<16xf32>
    %242 = vector.multi_reduction <add>, %231, %cst_63 [1] : vector<16x128xf32> to vector<16xf32>
    %243 = vector.shape_cast %242 : vector<16xf32> to vector<16x1xf32>
    %cst_64 = arith.constant 1.280000e+02 : f32
    %244 = vector.broadcast %cst_64 : f32 to vector<16x1xf32>
    %245 = arith.divf %243, %244 : vector<16x1xf32>
    %246 = arith.mulf %231, %231 : vector<16x128xf32>
    %cst_65 = arith.constant dense<0.000000e+00> : vector<16xf32>
    %247 = vector.multi_reduction <add>, %246, %cst_65 [1] : vector<16x128xf32> to vector<16xf32>
    %248 = vector.shape_cast %247 : vector<16xf32> to vector<16x1xf32>
    %cst_66 = arith.constant 1.280000e+02 : f32
    %249 = vector.broadcast %cst_66 : f32 to vector<16x1xf32>
    %250 = arith.divf %248, %249 : vector<16x1xf32>
    %251 = arith.mulf %245, %245 : vector<16x1xf32>
    %252 = arith.subf %250, %251 : vector<16x1xf32>
    %cst_67 = arith.constant 9.99999974E-6 : f32
    %253 = vector.broadcast %cst_67 : f32 to vector<16x1xf32>
    %254 = arith.addf %252, %253 : vector<16x1xf32>
    %255 = math.rsqrt %254 : vector<16x1xf32>
    %256 = arith.mulf %232, %255 : vector<16x1xf32>
    %257 = vector.broadcast %256 : vector<16x1xf32> to vector<16x128xf32>
    %258 = arith.mulf %257, %231 : vector<16x128xf32>
    %259 = arith.mulf %256, %245 : vector<16x1xf32>
    %260 = arith.subf %233, %259 : vector<16x1xf32>
    %261 = vector.broadcast %260 : vector<16x1xf32> to vector<16x128xf32>
    %262 = arith.addf %258, %261 : vector<16x128xf32>
    %263 = vector.broadcast %238 : vector<16x1xf32> to vector<16x128xf32>
    %264 = arith.mulf %263, %262 : vector<16x128xf32>
    %265 = math.sin %264 : vector<16x128xf32>
    %266 = arith.mulf %265, %265 : vector<16x128xf32>
    %267 = vector.broadcast %239 : vector<16x1xf32> to vector<16x128xf32>
    %268 = arith.mulf %267, %266 : vector<16x128xf32>
    %269 = arith.addf %262, %268 : vector<16x128xf32>
    %c4 = arith.constant 4 : index
    %c0_68 = arith.constant 0 : index
    %c0_69 = arith.constant 0 : index
    %270 = vector.load %arg4[%c4, %c0_68, %c0_69] : memref<6x16x48xbf16, #tpu.memory_space<vmem>>, vector<1x16x48xbf16>
    %271 = vector.shape_cast %270 : vector<1x16x48xbf16> to vector<16x48xbf16>
    %c5_i32 = arith.constant 5 : i32
    %272 = tpu.dynamic_rotate %269 by %c5_i32 dim 1 : vector<16x128xf32>, i32 -> vector<16x128xf32>
    %c5_i32_70 = arith.constant 5 : i32
    %273 = vector.broadcast %c5_i32_70 : i32 to vector<16x128xi32>
    %274 = arith.cmpi sge, %5, %273 : vector<16x128xi32>
    %c133_i32 = arith.constant 133 : i32
    %275 = vector.broadcast %c133_i32 : i32 to vector<16x128xi32>
    %276 = arith.cmpi slt, %5, %275 : vector<16x128xi32>
    %277 = arith.andi %274, %276 : vector<16x128xi1>
    %cst_71 = arith.constant 0.000000e+00 : f32
    %278 = vector.broadcast %cst_71 : f32 to vector<16x128xf32>
    %279 = arith.select %277, %272, %278 : vector<16x128xi1>, vector<16x128xf32>
    %c123_i32 = arith.constant 123 : i32
    %280 = tpu.dynamic_rotate %269 by %c123_i32 dim 1 : vector<16x128xf32>, i32 -> vector<16x128xf32>
    %c-5_i32 = arith.constant -5 : i32
    %281 = vector.broadcast %c-5_i32 : i32 to vector<16x128xi32>
    %282 = arith.cmpi sge, %5, %281 : vector<16x128xi32>
    %c123_i32_72 = arith.constant 123 : i32
    %283 = vector.broadcast %c123_i32_72 : i32 to vector<16x128xi32>
    %284 = arith.cmpi slt, %5, %283 : vector<16x128xi32>
    %285 = arith.andi %282, %284 : vector<16x128xi1>
    %cst_73 = arith.constant 0.000000e+00 : f32
    %286 = vector.broadcast %cst_73 : f32 to vector<16x128xf32>
    %287 = arith.select %285, %280, %286 : vector<16x128xi1>, vector<16x128xf32>
    %288 = tpu.concatenate %279, %269, %287 in 0 : vector<16x128xf32>, vector<16x128xf32>, vector<16x128xf32> -> vector<48x128xf32>
    %289 = arith.truncf %288 : vector<48x128xf32> to vector<48x128xbf16>
    %cst_74 = arith.constant dense<0.000000e+00> : vector<16x128xf32>
    %290 = tpu.matmul %271, %289, %cst_74 {dimension_numbers = #tpu.dot_dimension_numbers<[1], [0], [0], [1], [0, 0, 1, 1], [], []>} : vector<16x48xbf16>, vector<48x128xbf16>, vector<16x128xf32> -> vector<16x128xf32>
    %291 = vector.broadcast %236 : vector<16x1xf32> to vector<16x128xf32>
    %292 = arith.addf %290, %291 : vector<16x128xf32>
    %cst_75 = arith.constant dense<0.000000e+00> : vector<16xf32>
    %293 = vector.multi_reduction <add>, %292, %cst_75 [1] : vector<16x128xf32> to vector<16xf32>
    %294 = vector.shape_cast %293 : vector<16xf32> to vector<16x1xf32>
    %cst_76 = arith.constant 1.280000e+02 : f32
    %295 = vector.broadcast %cst_76 : f32 to vector<16x1xf32>
    %296 = arith.divf %294, %295 : vector<16x1xf32>
    %297 = arith.mulf %292, %292 : vector<16x128xf32>
    %cst_77 = arith.constant dense<0.000000e+00> : vector<16xf32>
    %298 = vector.multi_reduction <add>, %297, %cst_77 [1] : vector<16x128xf32> to vector<16xf32>
    %299 = vector.shape_cast %298 : vector<16xf32> to vector<16x1xf32>
    %cst_78 = arith.constant 1.280000e+02 : f32
    %300 = vector.broadcast %cst_78 : f32 to vector<16x1xf32>
    %301 = arith.divf %299, %300 : vector<16x1xf32>
    %302 = arith.mulf %296, %296 : vector<16x1xf32>
    %303 = arith.subf %301, %302 : vector<16x1xf32>
    %cst_79 = arith.constant 9.99999974E-6 : f32
    %304 = vector.broadcast %cst_79 : f32 to vector<16x1xf32>
    %305 = arith.addf %303, %304 : vector<16x1xf32>
    %306 = math.rsqrt %305 : vector<16x1xf32>
    %307 = arith.mulf %234, %306 : vector<16x1xf32>
    %308 = vector.broadcast %307 : vector<16x1xf32> to vector<16x128xf32>
    %309 = arith.mulf %308, %292 : vector<16x128xf32>
    %310 = arith.mulf %307, %296 : vector<16x1xf32>
    %311 = arith.subf %235, %310 : vector<16x1xf32>
    %312 = vector.broadcast %311 : vector<16x1xf32> to vector<16x128xf32>
    %313 = arith.addf %309, %312 : vector<16x128xf32>
    %314 = vector.broadcast %240 : vector<16x1xf32> to vector<16x128xf32>
    %315 = arith.mulf %314, %313 : vector<16x128xf32>
    %316 = math.sin %315 : vector<16x128xf32>
    %317 = arith.mulf %316, %316 : vector<16x128xf32>
    %318 = vector.broadcast %241 : vector<16x1xf32> to vector<16x128xf32>
    %319 = arith.mulf %318, %317 : vector<16x128xf32>
    %320 = arith.addf %313, %319 : vector<16x128xf32>
    %c5 = arith.constant 5 : index
    %c0_80 = arith.constant 0 : index
    %c0_81 = arith.constant 0 : index
    %321 = vector.load %arg4[%c5, %c0_80, %c0_81] : memref<6x16x48xbf16, #tpu.memory_space<vmem>>, vector<1x16x48xbf16>
    %322 = vector.shape_cast %321 : vector<1x16x48xbf16> to vector<16x48xbf16>
    %c1_i32_82 = arith.constant 1 : i32
    %323 = tpu.dynamic_rotate %320 by %c1_i32_82 dim 1 : vector<16x128xf32>, i32 -> vector<16x128xf32>
    %c1_i32_83 = arith.constant 1 : i32
    %324 = vector.broadcast %c1_i32_83 : i32 to vector<16x128xi32>
    %325 = arith.cmpi sge, %5, %324 : vector<16x128xi32>
    %c129_i32_84 = arith.constant 129 : i32
    %326 = vector.broadcast %c129_i32_84 : i32 to vector<16x128xi32>
    %327 = arith.cmpi slt, %5, %326 : vector<16x128xi32>
    %328 = arith.andi %325, %327 : vector<16x128xi1>
    %cst_85 = arith.constant 0.000000e+00 : f32
    %329 = vector.broadcast %cst_85 : f32 to vector<16x128xf32>
    %330 = arith.select %328, %323, %329 : vector<16x128xi1>, vector<16x128xf32>
    %c127_i32_86 = arith.constant 127 : i32
    %331 = tpu.dynamic_rotate %320 by %c127_i32_86 dim 1 : vector<16x128xf32>, i32 -> vector<16x128xf32>
    %c-1_i32_87 = arith.constant -1 : i32
    %332 = vector.broadcast %c-1_i32_87 : i32 to vector<16x128xi32>
    %333 = arith.cmpi sge, %5, %332 : vector<16x128xi32>
    %c127_i32_88 = arith.constant 127 : i32
    %334 = vector.broadcast %c127_i32_88 : i32 to vector<16x128xi32>
    %335 = arith.cmpi slt, %5, %334 : vector<16x128xi32>
    %336 = arith.andi %333, %335 : vector<16x128xi1>
    %cst_89 = arith.constant 0.000000e+00 : f32
    %337 = vector.broadcast %cst_89 : f32 to vector<16x128xf32>
    %338 = arith.select %336, %331, %337 : vector<16x128xi1>, vector<16x128xf32>
    %339 = tpu.concatenate %330, %320, %338 in 0 : vector<16x128xf32>, vector<16x128xf32>, vector<16x128xf32> -> vector<48x128xf32>
    %340 = arith.truncf %339 : vector<48x128xf32> to vector<48x128xbf16>
    %cst_90 = arith.constant dense<0.000000e+00> : vector<16x128xf32>
    %341 = tpu.matmul %322, %340, %cst_90 {dimension_numbers = #tpu.dot_dimension_numbers<[1], [0], [0], [1], [0, 0, 1, 1], [], []>} : vector<16x48xbf16>, vector<48x128xbf16>, vector<16x128xf32> -> vector<16x128xf32>
    %342 = vector.broadcast %237 : vector<16x1xf32> to vector<16x128xf32>
    %343 = arith.addf %341, %342 : vector<16x128xf32>
    %344 = arith.addf %231, %343 : vector<16x128xf32>
    %c0_91 = arith.constant 0 : index
    %c0_92 = arith.constant 0 : index
    %c0_93 = arith.constant 0 : index
    %345 = vector.load %arg5[%c0_91, %c0_92, %c0_93] : memref<1x16x128xf32, #tpu.memory_space<vmem>>, vector<1x16x128xf32>
    %346 = vector.shape_cast %345 : vector<1x16x128xf32> to vector<16x128xf32>
    %347 = vector.shape_cast %344 : vector<16x128xf32> to vector<1x16x128xf32>
    tpu.vector_store %arg5[%c0_91, %c0_92, %c0_93], %347 {strides = array<i32>} : memref<1x16x128xf32, #tpu.memory_space<vmem>>, vector<1x16x128xf32>,
    return
  }
  func.func @transform_0(%arg0: i32) -> (i32, i32, i32) {
    %c0_i32 = arith.constant 0 : i32
    %c0_i32_0 = arith.constant 0 : i32
    %c0_i32_1 = arith.constant 0 : i32
    return %arg0, %c0_i32, %c0_i32_0 : i32, i32, i32
  }
  func.func @transform_1(%arg0: i32) -> (i32, i32, i32) {
    %c0_i32 = arith.constant 0 : i32
    %c0_i32_0 = arith.constant 0 : i32
    %c0_i32_1 = arith.constant 0 : i32
    return %arg0, %c0_i32, %c0_i32_0 : i32, i32, i32
  }
  func.func @transform_2(%arg0: i32) -> (i32, i32) {
    %c0_i32 = arith.constant 0 : i32
    %c0_i32_0 = arith.constant 0 : i32
    %c0_i32_1 = arith.constant 0 : i32
    return %c0_i32, %c0_i32_0 : i32, i32
  }
  func.func @transform_3(%arg0: i32) -> (i32, i32, i32) {
    %c0_i32 = arith.constant 0 : i32
    %c0_i32_0 = arith.constant 0 : i32
    %c0_i32_1 = arith.constant 0 : i32
    %c0_i32_2 = arith.constant 0 : i32
    return %c0_i32, %c0_i32_0, %c0_i32_1 : i32, i32, i32
  }
  func.func @transform_4(%arg0: i32) -> (i32, i32, i32) {
    %c0_i32 = arith.constant 0 : i32
    %c0_i32_0 = arith.constant 0 : i32
    %c0_i32_1 = arith.constant 0 : i32
    return %arg0, %c0_i32, %c0_i32_0 : i32, i32, i32
  }
}

</mosaic_0001>

<llo_original>
// kernel: tpu_custom_call.1
$region0: #{tpu_custom_call.1}
  #allocation0 [shape = 'u32[]', space=smem, size = 0x4, offset = 0x4, fixed_abs, tag = 'smem constant byte address 0x4 - core index']
  #allocation1 [shape = 'u32[144,128]{1,0:T(1,128)}', space=vmem, size = 0x12000, scoped, tag = 'internal scratch']
  %s0 = inlined_call_operand.hbm [shape: f32[2,16,128], index: 0, kind: input, shape index: {}]
  %s1 = inlined_call_operand.vmem [shape: f32[2,16,12], index: 1, kind: input, shape index: {}]
  %s2 = inlined_call_operand.vmem [shape: f32[16,18], index: 2, kind: input, shape index: {}]
  %s3 = inlined_call_operand.vmem [shape: bf16[6,16,48], index: 3, kind: input, shape index: {}]
  %s4 = inlined_call_operand.hbm [shape: f32[2,16,128], index: 4, kind: output, shape index: {}]
  %s5 = sld [smem:[#allocation0]]
  $region53: #{tpu_custom_call.1} parent=0
    _
  %s7 = ssub.s32 1, %s5
  %s8 = scalar_select 0, %s7, %s5
  $region1: #{tpu_custom_call.1} parent=0
    #allocation2 [shape = 'u8[16384]{0}', space=vmem, size = 0x4000, scoped, tag = 'input window, operand 0']
    #allocation3 [shape = 's32[2]{0}', space=sflag, size = 0x8, scoped, tag = 'scoped memory for tpu_custom_call.1']
    #allocation4 [shape = 's32[2]{0}', space=sflag, size = 0x8, scoped, tag = 'scoped memory for tpu_custom_call.1']
    #allocation5 [shape = 'u8[16384]{0}', space=vmem, size = 0x4000, scoped, tag = 'output window, operand 0']
    %9 = vsyncpa [#allocation3], 0
    %s10 = scalar_lea.sflag [#allocation3], 1
    %11 = vsyncpa %s10, 0
    %12 = vsyncpa [#allocation4], 0
    %s13 = scalar_lea.sflag [#allocation4], 1
    %14 = vsyncpa %s13, 0
    loop: start=0, step=1, limit=4
    $region2: #{tpu_custom_call.1} parent=1 // loop_pre_header
      _
    $region3: #{tpu_custom_call.1} parent=1 // loop_header
      %s16 = sphi 0, %s20
      %p17 = scmp.ge.s32.totalorder %s16, 4
      %s26 = sphi 0, %s28
      %s29 = sphi 0, %s26
      %s30 = sphi 0, %s29
      %s46 = sphi 0, %s30
      %s52 = sphi 0, %s54
      %s55 = sphi 0, %s52
      %s56 = sphi 0, %s55
      %s72 = sphi 0, %s56
      %s76 = sphi 0, %s76
      %s78 = sphi 0, %s76
      %s79 = sphi 0, %s78
      %s93 = sphi 0, %s79
      %s97 = sphi 0, %s97
      %s99 = sphi 0, %s97
      %s100 = sphi 0, %s99
      %s114 = sphi 0, %s100
      %s120 = sphi 0, %s122
      %s123 = sphi 0, %s120
      %s124 = sphi 0, %s123
      %s140 = sphi 0, %s124
    $region4: #{tpu_custom_call.1} parent=1 // loop_header_branch
      %19 = sbr.rel (%p17) target = $region8
    $region5: #{tpu_custom_call.1} parent=1 // loop_body
      %s21 = ssub.s32 %s16, 1
      %s22 = ssub.s32 %s16, 2
      %s23 = sadd.s32 %s16, 1
      %s24 = ssub.s32 %s16, %s23
      %p25 = scmp.eq.s32.totalorder %s24, 0
      %s27 = sadd.s32 %s26, 1
      %s28 = scalar_select %p25, %s26, %s27
      %p31 = pneg %p25
      %p32 = scmp.eq.s32.totalorder %s16, 1
      %p33 = por %p31, %p32
      %p34 = scmp.ne.s32.totalorder %s26, %s29
      %p35 = scmp.eq.s32.totalorder %s16, 0
      %p36 = por %p34, %p35
      %p37 = scmp.ne.s32.totalorder %s26, %s29
      %p38 = scmp.eq.s32.totalorder %s21, 1
      %p39 = por %p37, %p38
      %p40 = scmp.ne.s32.totalorder %s29, %s30
      %p41 = scmp.eq.s32.totalorder %s21, 0
      %p42 = por %p40, %p41
      %p43 = scmp.ne.s32.totalorder %s29, %s30
      %p44 = scmp.eq.s32.totalorder %s22, 1
      %p45 = por %p43, %p44
      %p47 = scmp.ne.s32.totalorder %s30, %s46
      %p48 = scmp.eq.s32.totalorder %s22, 0
      %p49 = por %p47, %p48
      %s50 = ssub.s32 %s16, %s23
      %p51 = scmp.eq.s32.totalorder %s50, 0
      %s53 = sadd.s32 %s52, 1
      %s54 = scalar_select %p51, %s52, %s53
      %p57 = pneg %p51
      %p58 = scmp.eq.s32.totalorder %s16, 1
      %p59 = por %p57, %p58
      %p60 = scmp.ne.s32.totalorder %s52, %s55
      %p61 = scmp.eq.s32.totalorder %s16, 0
      %p62 = por %p60, %p61
      %p63 = scmp.ne.s32.totalorder %s52, %s55
      %p64 = scmp.eq.s32.totalorder %s21, 1
      %p65 = por %p63, %p64
      %p66 = scmp.ne.s32.totalorder %s55, %s56
      %p67 = scmp.eq.s32.totalorder %s21, 0
      %p68 = por %p66, %p67
      %p69 = scmp.ne.s32.totalorder %s55, %s56
      %p70 = scmp.eq.s32.totalorder %s22, 1
      %p71 = por %p69, %p70
      %p73 = scmp.ne.s32.totalorder %s56, %s72
      %p74 = scmp.eq.s32.totalorder %s22, 0
      %p75 = por %p73, %p74
      %s77 = sadd.s32 %s76, 1
      %p80 = scmp.eq.s32.totalorder %s16, 1
      %p81 = scmp.ne.s32.totalorder %s76, %s78
      %p82 = scmp.eq.s32.totalorder %s16, 0
      %p83 = por %p81, %p82
      %p84 = scmp.ne.s32.totalorder %s76, %s78
      %p85 = scmp.eq.s32.totalorder %s21, 1
      %p86 = por %p84, %p85
      %p87 = scmp.ne.s32.totalorder %s78, %s79
      %p88 = scmp.eq.s32.totalorder %s21, 0
      %p89 = por %p87, %p88
      %p90 = scmp.ne.s32.totalorder %s78, %s79
      %p91 = scmp.eq.s32.totalorder %s22, 1
      %p92 = por %p90, %p91
      %p94 = scmp.ne.s32.totalorder %s79, %s93
      %p95 = scmp.eq.s32.totalorder %s22, 0
      %p96 = por %p94, %p95
      %s98 = sadd.s32 %s97, 1
      %p101 = scmp.eq.s32.totalorder %s16, 1
      %p102 = scmp.ne.s32.totalorder %s97, %s99
      %p103 = scmp.eq.s32.totalorder %s16, 0
      %p104 = por %p102, %p103
      %p105 = scmp.ne.s32.totalorder %s97, %s99
      %p106 = scmp.eq.s32.totalorder %s21, 1
      %p107 = por %p105, %p106
      %p108 = scmp.ne.s32.totalorder %s99, %s100
      %p109 = scmp.eq.s32.totalorder %s21, 0
      %p110 = por %p108, %p109
      %p111 = scmp.ne.s32.totalorder %s99, %s100
      %p112 = scmp.eq.s32.totalorder %s22, 1
      %p113 = por %p111, %p112
      %p115 = scmp.ne.s32.totalorder %s100, %s114
      %p116 = scmp.eq.s32.totalorder %s22, 0
      %p117 = por %p115, %p116
      %s118 = ssub.s32 %s16, %s23
      %p119 = scmp.eq.s32.totalorder %s118, 0
      %s121 = sadd.s32 %s120, 1
      %s122 = scalar_select %p119, %s120, %s121
      %p125 = pneg %p119
      %p126 = scmp.eq.s32.totalorder %s16, 1
      %p127 = por %p125, %p126
      %p128 = scmp.ne.s32.totalorder %s120, %s123
      %p129 = scmp.eq.s32.totalorder %s16, 0
      %p130 = por %p128, %p129
      %p131 = scmp.ne.s32.totalorder %s120, %s123
      %p132 = scmp.eq.s32.totalorder %s21, 1
      %p133 = por %p131, %p132
      %p134 = scmp.ne.s32.totalorder %s123, %s124
      %p135 = scmp.eq.s32.totalorder %s21, 0
      %p136 = por %p134, %p135
      %p137 = scmp.ne.s32.totalorder %s123, %s124
      %p138 = scmp.eq.s32.totalorder %s22, 1
      %p139 = por %p137, %p138
      %p141 = scmp.ne.s32.totalorder %s124, %s140
      %p142 = scmp.eq.s32.totalorder %s22, 0
      %p143 = por %p141, %p142
      %p144 = scmp.le.s32.totalorder 1, %s16
      %p145 = scmp.lt.s32.totalorder %s16, 3
      %p146 = pnand %p144, %p145
      %p147 = pneg %p146
      // Predicated region
      $region9: #{tpu_custom_call.1} parent=5 // pred_check
        _
      $region10: #{tpu_custom_call.1} parent=5 // pred_check_branch
        %149 = sbr.rel (%p146) target = $region12
      $region11: #{tpu_custom_call.1} parent=5 // pred_region
        %s150 = ssub.s32 %s16, 1
        // Predicated region
        $region13: #{tpu_custom_call.1} parent=11 // pred_check
          %p151 = pneg %p89
        $region14: #{tpu_custom_call.1} parent=11 // pred_check_branch
          %153 = sbr.rel (%p151) target = $region16
        $region15: #{tpu_custom_call.1} parent=11 // pred_region
          _
        $region16: #{tpu_custom_call.1} parent=11 // pred_fallthru
          _
        // Predicated region
        $region17: #{tpu_custom_call.1} parent=11 // pred_check
          %p154 = pneg %p110
        $region18: #{tpu_custom_call.1} parent=11 // pred_check_branch
          %156 = sbr.rel (%p154) target = $region20
        $region19: #{tpu_custom_call.1} parent=11 // pred_region
          _
        $region20: #{tpu_custom_call.1} parent=11 // pred_fallthru
          _
      $region12: #{tpu_custom_call.1} parent=5 // pred_fallthru
        _
      %p157 = scmp.lt.s32.totalorder %s16, 2
      // Predicated region
      $region21: #{tpu_custom_call.1} parent=5 // pred_check
        %p158 = pneg %p157
      $region22: #{tpu_custom_call.1} parent=5 // pred_check_branch
        %160 = sbr.rel (%p158) target = $region24
      $region23: #{tpu_custom_call.1} parent=5 // pred_region
        // Predicated region
        $region25: #{tpu_custom_call.1} parent=23 // pred_check
          %p161 = pneg %p36
        $region26: #{tpu_custom_call.1} parent=23 // pred_check_branch
          %163 = sbr.rel (%p161) target = $region28
        $region27: #{tpu_custom_call.1} parent=23 // pred_region
          %s164 = sand.u32 %s26, 1
          %s165 = scalar_lea.sflag [#allocation3], %s164
          %s166 = sand.u32 %s26, 1
          %s167 = smul.addr %s166, 16
          %s168 = scalar_lea.vmem [#allocation2], %s167
          %s170 = ssub.s32 256, 256
          %171 = vsyncadd %s165, %s170
          %s172 = smul.addr %s16, 2
          %s173 = smul.addr %s172, 128
          %s174 = scalar_lea.hbm %s0, %s173
          %s175 = sshll.u32 %s168, 4
          %s176 = int_to_ptr.vmem [resolvable:$true] %s175
          %181 = dma.hbm_to_vmem [thread:$0]  %s174, 256, %s176, %s165, 128, 128, 8
        $region28: #{tpu_custom_call.1} parent=23 // pred_fallthru
          _
        // Predicated region
        $region29: #{tpu_custom_call.1} parent=23 // pred_check
          %p182 = pneg %p62
        $region30: #{tpu_custom_call.1} parent=23 // pred_check_branch
          %184 = sbr.rel (%p182) target = $region32
        $region31: #{tpu_custom_call.1} parent=23 // pred_region
          %p185 = scmp.lt.s32.totalorder %s16, 1
          %s186 = scalar_select %p185, %s16, 1
          %s187 = smul.addr %s186, 2
          %s188 = smul.addr %s187, 8
          %s189 = scalar_lea.vmem %s1, %s188
        $region32: #{tpu_custom_call.1} parent=23 // pred_fallthru
          _
      $region24: #{tpu_custom_call.1} parent=5 // pred_fallthru
        _
      %p190 = scmp.le.s32.totalorder 1, %s16
      %p191 = scmp.lt.s32.totalorder %s16, 3
      %p192 = pnand %p190, %p191
      %p193 = pneg %p192
      // Predicated region
      $region33: #{tpu_custom_call.1} parent=5 // pred_check
        _
      $region34: #{tpu_custom_call.1} parent=5 // pred_check_branch
        %195 = sbr.rel (%p192) target = $region36
      $region35: #{tpu_custom_call.1} parent=5 // pred_region
        %s196 = ssub.s32 %s16, 1
        %s197 = sand.u32 %s29, 1
        %s198 = scalar_lea.sflag [#allocation3], %s197
        %s199 = sand.u32 %s29, 1
        %s200 = smul.addr %s199, 16
        %s201 = scalar_lea.vmem [#allocation2], %s200
        // Predicated region
        $region37: #{tpu_custom_call.1} parent=35 // pred_check
          %p202 = pneg %p42
        $region38: #{tpu_custom_call.1} parent=35 // pred_check_branch
          %204 = sbr.rel (%p202) target = $region40
        $region39: #{tpu_custom_call.1} parent=35 // pred_region
          %205 = dma.done %s198, 256
        $region40: #{tpu_custom_call.1} parent=35 // pred_fallthru
          _
        %s206 = sand.u32 %s29, 1
        %s207 = scalar_lea.sflag [#allocation3], %s206
        %s208 = sand.u32 %s29, 1
        %s209 = smul.addr %s208, 16
        %s210 = scalar_lea.vmem [#allocation2], %s209
        %p211 = pneg %p42
        %p212 = pneg %p39
        %p213 = scmp.lt.s32.totalorder %s21, 1
        %s214 = scalar_select %p213, %s21, 1
        %s215 = smul.addr %s214, 2
        %s216 = smul.addr %s215, 8
        %s217 = scalar_lea.vmem %s1, %s216
        %p218 = pneg %p68
        %p219 = pneg %p65
        %p220 = pneg %p89
        %p221 = pneg %p86
        %p222 = pneg %p110
        %p223 = pneg %p107
        %p224 = pneg %p136
        %p225 = pneg %p133
        %s226 = sand.u32 %s123, 1
        %s227 = scalar_lea.sflag [#allocation4], %s226
        %s228 = sand.u32 %s123, 1
        %s229 = smul.addr %s228, 16
        %s230 = scalar_lea.vmem [#allocation5], %s229
        %p231 = scmp.lt.s32.totalorder %s21, 1
        %s232 = scalar_select %p231, %s21, 1
        %s233 = smul.addr %s232, 2
        %s234 = smul.addr %s233, 8
        %s235 = scalar_lea.vmem %s1, %s234
        %v237 = vld [vmem:[%s201] sm:$0xff]
        %v238 = vld [vmem:[%s201 + $0x8] sm:$0xff]
        %v239 = vld [vmem:[%s235] sm:$0xff]
        %v240 = vld [vmem:[%s235 + $0x8] sm:$0xff]
        %v241 = vld [vmem:[%s2] sm:$0xff]
        %v242 = vld [vmem:[%s2 + $0x8] sm:$0xff]
        %v243 = vlaneseq
        %v244 = vand.u32 %v243, 127
        %245 = vadd.xlane.f32.xlu0 %v237
        %v246 = vpop.xlane.xlu0 %245
        %247 = vadd.xlane.f32.xlu0 %v238
        %v248 = vpop.xlane.xlu0 %247
        %v249 = vrcp.pop 128.0
        %v250 = vmul.f32 %v246, %v249
        %v251 = vmul.f32 %v248, %v249
        %v252 = vmul.f32 %v237, %v237
        %v253 = vmul.f32 %v238, %v238
        %254 = vadd.xlane.f32.xlu0 %v252
        %v255 = vpop.xlane.xlu0 %254
        %256 = vadd.xlane.f32.xlu0 %v253
        %v257 = vpop.xlane.xlu0 %256
        %v258 = vmul.f32 %v255, %v249
        %v259 = vmul.f32 %v257, %v249
        %v260 = vmul.f32 %v250, %v250
        %v261 = vmul.f32 %v251, %v251
        %v262 = vsub.f32 %v258, %v260
        %v263 = vsub.f32 %v259, %v261
        %v264 = vadd.f32 %v262, 1e-05
        %v265 = vadd.f32 %v263, 1e-05
        %v266 = vrsqrt.pop %v264
        %v267 = vrsqrt.pop %v265
        %v268 = vmul.f32 %v239, %v266
        %v269 = vmul.f32 %v240, %v267
        %271 = vset.pattern.permute.xlu0 0
        %272 = vperm.xlu0 %271, %v268
        %v273 = vpop.permute.xlu0 %272
        %276 = vset.pattern.permute.xlu0 0
        %277 = vperm.xlu0 %276, %v269
        %v278 = vpop.permute.xlu0 %277
        %v280 = vmul.f32 %v273, %v237
        %v281 = vmul.f32 %v278, %v238
        %v282 = vmul.f32 %v268, %v250
        %v283 = vmul.f32 %v269, %v251
        %286 = vrot.lane.b32.xlu0 %v282, 1
        %v287 = vpop.permute.xlu0 %286
        %288 = vrot.lane.b32.xlu0 %v283, 1
        %v289 = vpop.permute.xlu0 %288
        %v292 = vsub.f32 %v239, %v287
        %v293 = vsub.f32 %v240, %v289
        %295 = vset.pattern.permute.xlu0 1
        %296 = vperm.xlu0 %295, %v292
        %v297 = vpop.permute.xlu0 %296
        %300 = vset.pattern.permute.xlu0 1
        %301 = vperm.xlu0 %300, %v293
        %v302 = vpop.permute.xlu0 %301
        %v304 = vadd.f32 %v280, %v297
        %v305 = vadd.f32 %v281, %v302
        %307 = vset.pattern.permute.xlu0 2
        %308 = vperm.xlu0 %307, %v241
        %v309 = vpop.permute.xlu0 %308
        %312 = vset.pattern.permute.xlu0 2
        %313 = vperm.xlu0 %312, %v242
        %v314 = vpop.permute.xlu0 %313
        %v316 = vmul.f32 %v309, %v304
        %v317 = vmul.f32 %v314, %v305
        %v318 = vand.u32 2147483647, %v316
        %vm319 = vcmp.le.f32.partialorder %v318, 0.7853982
        %vm320 = vcmp.lt.s32.totalorder %v316, 0
        %v321 = vand.u32 %v316, 2139095040
        %v322 = vshrl.u32 %v321, 23
        %v323 = vsub.s32 %v322, 127
        %v324 = vand.u32 2147483647, %v316
        %v325 = vand.u32 %v324, 8388607
        %v326 = vor.u32 %v325, 8388608
        %v327 = vsub.s32 0, %v326
        %v328 = vadd.s32 %v323, 1
        %vm329 = vcmp.gt.s32.totalorder %v328, 0
        %v330 = vsel %vm329, %v328, 0
        %v331 = vshrl.u32 %v330, 5
        %v332 = vand.u32 %v330, 31
        %v333 = vsub.s32 32, %v332
        %v334 = vshrl.u32 683565275, %v333
        %v335 = vshll.u32 683565275, %v332
        %v336 = vshrl.u32 2475754826, %v333
        %v337 = vor.u32 %v335, %v336
        %v338 = vshll.u32 2475754826, %v332
        %v339 = vshrl.u32 2131351028, %v333
        %v340 = vor.u32 %v338, %v339
        %v341 = vshll.u32 2131351028, %v332
        %v342 = vshrl.u32 2102212464, %v333
        %v343 = vor.u32 %v341, %v342
        %v344 = vshll.u32 2102212464, %v332
        %v345 = vshrl.u32 920167782, %v333
        %v346 = vor.u32 %v344, %v345
        %v347 = vshll.u32 920167782, %v332
        %v348 = vshrl.u32 1326507024, %v333
        %v349 = vor.u32 %v347, %v348
        %vm350 = vcmp.lt.s32.totalorder %v331, 1
        %vm351 = vcmp.lt.s32.totalorder %v331, 2
        %vm352 = vcmp.lt.s32.totalorder %v331, 3
        %vm353 = vcmp.lt.s32.totalorder %v331, 4
        %v354 = vsel %vm350, %v334, %v337
        %v355 = vsel %vm353, %v343, 2102212464
        %v356 = vsel %vm352, %v340, %v355
        %v357 = vsel %vm351, %v354, %v356
        %v358 = vsel %vm350, %v337, %v340
        %v359 = vsel %vm353, %v346, 920167782
        %v360 = vsel %vm352, %v343, %v359
        %v361 = vsel %vm351, %v358, %v360
        %v362 = vsel %vm350, %v340, %v343
        %v363 = vsel %vm353, %v349, 1326507024
        %v364 = vsel %vm352, %v346, %v363
        %v365 = vsel %vm351, %v362, %v364
        %v366 = vshll.u32 %v326, 8
        %v367 = vmul.u32.u64.compose %v366, %v365
        %v368 = vextract.low.u32 %v367
        %v369 = vextract.high.u32 %v367
        %v370 = vmul.u32.u64.compose %v366, %v361
        %v371 = vextract.low.u32 %v370
        %v372 = vextract.high.u32 %v370
        %v373 = vmul.u32 %v366, %v357
        %v374 = vadd.s32 %v369, %v371
        %vm375 = vc.u32 %v369, %v371
        %v376 = vadd.s32 %v372, 1
        %v377 = vsel %vm375, %v376, %v372
        %v378 = vadd.s32 %v373, %v377
        %v379 = vadd.s32 %v378, 536870912
        %v380 = vshrl.u32 %v379, 30
        %v381 = vshll.u32 %v380, 30
        %v382 = vsub.s32 %v378, %v381
        %vm383 = vcmp.lt.s32.totalorder %v382, 0
        %v384 = vsub.s32 0, %v382
        %v385 = vsel %vm383, %v384, %v382
        %v386 = vclz %v385
        %v387 = vsub.s32 %v386, 2
        %vm388 = vcmp.gt.s32.totalorder 0, %v387
        %v389 = vsel %vm388, 0, %v387
        %v390 = vsub.s32 32, %v389
        %v391 = vshll.u32 %v382, %v389
        %v392 = vshrl.u32 %v374, %v390
        %v393 = vor.u32 %v391, %v392
        %v394 = vsub.s32 4294967266, %v389
        %v395 = vadd.s32 %v394, 127
        %v396 = vshll.u32 %v395, 23
        %v397 = vor.u32 4788187, %v396
        %v398 = vand.u32 2147483647, %v397
        %v400 = vcvt.s32.f32 %v393
        %v401 = vmul.f32 %v400, %v398
        %v402 = vxor.u32 %v401, 2147483648
        %v403 = vsel %vm320, %v402, %v401
        %v404 = vsub.s32 4, %v380
        %v405 = vsel %vm320, %v404, %v380
        %v406 = vsel %vm319, %v316, %v403
        %v407 = vsel %vm319, 0, %v405
        %v408 = vcosq.f32.pop %v406
        %v409 = vsinq.f32.pop %v406
        %vm410 = vweird.f32 %v316
        %v411 = vadd.s32 %v407, 3
        %v412 = vand.u32 %v411, 3
        %vm413 = vcmp.lt.s32.totalorder %v412, 2
        %vm414 = vcmp.eq.s32.totalorder %v412, 0
        %v415 = vxor.u32 %v409, 2147483648
        %v416 = vsel %vm414, %v408, %v415
        %vm417 = vcmp.eq.s32.totalorder %v412, 2
        %v418 = vxor.u32 %v408, 2147483648
        %v419 = vsel %vm417, %v418, %v409
        %v420 = vsel %vm413, %v416, %v419
        %v421 = vsel %vm410, nan, %v420
        %v422 = vand.u32 2147483647, %v317
        %vm423 = vcmp.le.f32.partialorder %v422, 0.7853982
        %vm424 = vcmp.lt.s32.totalorder %v317, 0
        %v425 = vand.u32 %v317, 2139095040
        %v426 = vshrl.u32 %v425, 23
        %v427 = vsub.s32 %v426, 127
        %v428 = vand.u32 2147483647, %v317
        %v429 = vand.u32 %v428, 8388607
        %v430 = vor.u32 %v429, 8388608
        %v431 = vsub.s32 0, %v430
        %v432 = vadd.s32 %v427, 1
        %vm433 = vcmp.gt.s32.totalorder %v432, 0
        %v434 = vsel %vm433, %v432, 0
        %v435 = vshrl.u32 %v434, 5
        %v436 = vand.u32 %v434, 31
        %v437 = vsub.s32 32, %v436
        %v438 = vshrl.u32 683565275, %v437
        %v439 = vshll.u32 683565275, %v436
        %v440 = vshrl.u32 2475754826, %v437
        %v441 = vor.u32 %v439, %v440
        %v442 = vshll.u32 2475754826, %v436
        %v443 = vshrl.u32 2131351028, %v437
        %v444 = vor.u32 %v442, %v443
        %v445 = vshll.u32 2131351028, %v436
        %v446 = vshrl.u32 2102212464, %v437
        %v447 = vor.u32 %v445, %v446
        %v448 = vshll.u32 2102212464, %v436
        %v449 = vshrl.u32 920167782, %v437
        %v450 = vor.u32 %v448, %v449
        %v451 = vshll.u32 920167782, %v436
        %v452 = vshrl.u32 1326507024, %v437
        %v453 = vor.u32 %v451, %v452
        %vm454 = vcmp.lt.s32.totalorder %v435, 1
        %vm455 = vcmp.lt.s32.totalorder %v435, 2
        %vm456 = vcmp.lt.s32.totalorder %v435, 3
        %vm457 = vcmp.lt.s32.totalorder %v435, 4
        %v458 = vsel %vm454, %v438, %v441
        %v459 = vsel %vm457, %v447, 2102212464
        %v460 = vsel %vm456, %v444, %v459
        %v461 = vsel %vm455, %v458, %v460
        %v462 = vsel %vm454, %v441, %v444
        %v463 = vsel %vm457, %v450, 920167782
        %v464 = vsel %vm456, %v447, %v463
        %v465 = vsel %vm455, %v462, %v464
        %v466 = vsel %vm454, %v444, %v447
        %v467 = vsel %vm457, %v453, 1326507024
        %v468 = vsel %vm456, %v450, %v467
        %v469 = vsel %vm455, %v466, %v468
        %v470 = vshll.u32 %v430, 8
        %v471 = vmul.u32.u64.compose %v470, %v469
        %v472 = vextract.low.u32 %v471
        %v473 = vextract.high.u32 %v471
        %v474 = vmul.u32.u64.compose %v470, %v465
        %v475 = vextract.low.u32 %v474
        %v476 = vextract.high.u32 %v474
        %v477 = vmul.u32 %v470, %v461
        %v478 = vadd.s32 %v473, %v475
        %vm479 = vc.u32 %v473, %v475
        %v480 = vadd.s32 %v476, 1
        %v481 = vsel %vm479, %v480, %v476
        %v482 = vadd.s32 %v477, %v481
        %v483 = vadd.s32 %v482, 536870912
        %v484 = vshrl.u32 %v483, 30
        %v485 = vshll.u32 %v484, 30
        %v486 = vsub.s32 %v482, %v485
        %vm487 = vcmp.lt.s32.totalorder %v486, 0
        %v488 = vsub.s32 0, %v486
        %v489 = vsel %vm487, %v488, %v486
        %v490 = vclz %v489
        %v491 = vsub.s32 %v490, 2
        %vm492 = vcmp.gt.s32.totalorder 0, %v491
        %v493 = vsel %vm492, 0, %v491
        %v494 = vsub.s32 32, %v493
        %v495 = vshll.u32 %v486, %v493
        %v496 = vshrl.u32 %v478, %v494
        %v497 = vor.u32 %v495, %v496
        %v498 = vsub.s32 4294967266, %v493
        %v499 = vadd.s32 %v498, 127
        %v500 = vshll.u32 %v499, 23
        %v501 = vor.u32 4788187, %v500
        %v502 = vand.u32 2147483647, %v501
        %v504 = vcvt.s32.f32 %v497
        %v505 = vmul.f32 %v504, %v502
        %v506 = vxor.u32 %v505, 2147483648
        %v507 = vsel %vm424, %v506, %v505
        %v508 = vsub.s32 4, %v484
        %v509 = vsel %vm424, %v508, %v484
        %v510 = vsel %vm423, %v317, %v507
        %v511 = vsel %vm423, 0, %v509
        %v512 = vcosq.f32.pop %v510
        %v513 = vsinq.f32.pop %v510
        %vm514 = vweird.f32 %v317
        %v515 = vadd.s32 %v511, 3
        %v516 = vand.u32 %v515, 3
        %vm517 = vcmp.lt.s32.totalorder %v516, 2
        %vm518 = vcmp.eq.s32.totalorder %v516, 0
        %v519 = vxor.u32 %v513, 2147483648
        %v520 = vsel %vm518, %v512, %v519
        %vm521 = vcmp.eq.s32.totalorder %v516, 2
        %v522 = vxor.u32 %v512, 2147483648
        %v523 = vsel %vm521, %v522, %v513
        %v524 = vsel %vm517, %v520, %v523
        %v525 = vsel %vm514, nan, %v524
        %v526 = vmul.f32 %v421, %v421
        %v527 = vmul.f32 %v525, %v525
        %528 = vset.pattern.permute.xlu0 3
        %529 = vperm.xlu0 %528, %v241
        %v530 = vpop.permute.xlu0 %529
        %532 = vset.pattern.permute.xlu0 3
        %533 = vperm.xlu0 %532, %v242
        %v534 = vpop.permute.xlu0 %533
        %v536 = vmul.f32 %v530, %v526
        %v537 = vmul.f32 %v534, %v527
        %v538 = vadd.f32 %v304, %v536
        %v539 = vadd.f32 %v305, %v537
        %v540 = vld [vmem:[%s3] sm:$0xf]
        %v541 = vld [vmem:[%s3 + $0x4] sm:$0xf]
        %542 = vrot.lane.b32.xlu0 %v538, 1
        %v543 = vpop.permute.xlu0 %542
        %544 = vrot.lane.b32.xlu0 %v539, 1
        %v545 = vpop.permute.xlu0 %544
        %vm546 = vcmp.ge.s32.totalorder %v244, 1
        %vm547 = vcmp.lt.s32.totalorder %v244, 129
        %vm548 = vmand %vm546, %vm547
        %v549 = vsel %vm548, %v543, 0.0
        %v550 = vsel %vm548, %v545, 0.0
        %551 = vrot.lane.b32.xlu0 %v538, 127
        %v552 = vpop.permute.xlu0 %551
        %553 = vrot.lane.b32.xlu0 %v539, 127
        %v554 = vpop.permute.xlu0 %553
        %vm555 = vcmp.ge.s32.totalorder %v244, 4294967295
        %vm556 = vcmp.lt.s32.totalorder %v244, 127
        %vm557 = vmand %vm555, %vm556
        %v558 = vsel %vm557, %v552, 0.0
        %v559 = vsel %vm557, %v554, 0.0
        %v560 = vpack.c.bf16 %v550, %v549
        %v561 = vpack.c.bf16 %v539, %v538
        %v562 = vpack.c.bf16 %v559, %v558
        %563 = vset.pattern.permute.xlu0 0
        %564 = vperm.xlu0 %563, %v241
        %v565 = vpop.permute.xlu0 %564
        %567 = vset.pattern.permute.xlu0 0
        %568 = vperm.xlu0 %567, %v242
        %v569 = vpop.permute.xlu0 %568
        %v573 = vunpack.c.l.b16 %v540
        %v574 = vunpack.c.l.b16 %v541
        %v575 = vpack.c.b16 %v574, %v573
        %vm576 = vcmask 392192
        %v578 = vsel %vm576, %v575, 0
        %580 = vmatprep.subr.bf16.mxu0 0
        %581 = vmatpush1.bf16.msra.mxu0 %v560
        %582 = vmatprep.subr.bf16.mxu0 0
        %583 = vmatpush1.bf16.msra.mxu0 %v561
        %584 = vmatprep.subr.bf16.mxu0 0
        %585 = vmatpush1.bf16.msra.mxu0 %v562
        %586 = vmatprep.subr.bf16.mxu0 0
        %587 = vmatpush1.bf16.msra.mxu0 0
        %588 = vmatprep.subr.bf16.mxu0 0
        %589 = vmatpush1.bf16.msra.mxu0 0
        %590 = vmatprep.subr.bf16.mxu0 0
        %591 = vmatpush1.bf16.msra.mxu0 0
        %592 = vmatprep.subr.bf16.mxu0 0
        %593 = vmatpush1.bf16.msra.mxu0 0
        %594 = vmatprep.subr.bf16.mxu0 0
        %595 = vmatpush1.bf16.msra.mxu0 0
        %596 = vmatprep.subr.bf16.mxu0 0
        %597 = vmatpush1.bf16.msra.mxu0 0
        %598 = vmatprep.subr.bf16.mxu0 0
        %599 = vmatpush1.bf16.msra.mxu0 0
        %600 = vmatprep.subr.bf16.mxu0 0
        %601 = vmatpush1.bf16.msra.mxu0 0
        %602 = vmatprep.subr.bf16.mxu0 0
        %603 = vmatpush1.bf16.msra.mxu0 0
        %604 = vmatprep.subr.bf16.mxu0 0
        %605 = vmatpush1.bf16.msra.mxu0 0
        %606 = vmatprep.subr.bf16.mxu0 0
        %607 = vmatpush1.bf16.msra.mxu0 0
        %608 = vmatprep.subr.bf16.mxu0 0
        %609 = vmatpush1.bf16.msra.mxu0 0
        %610 = vmatprep.subr.bf16.mxu0 0
        %611 = vmatpush1.bf16.msra.mxu0 0
        %612 = vmatprep.mubr.bf16.mxu0 0
        %613 = vmatmul.mubr.bf16.gmra.mrb[0].mxu0 %v578
        %v614 = vpop.f32.mrb[0].mxu0
        %v615 = vadd.f32 %v565, %v614
        %v616 = vpop.f32.mrb[0].mxu0
        %v617 = vpop.f32.mrb[0].mxu0
        %v618 = vadd.f32 %v569, %v617
        %v619 = vpop.f32.mrb[0].mxu0
        %620 = vdwg.mxu0
        %621 = vadd.xlane.f32.xlu0 %v615
        %v622 = vpop.xlane.xlu0 %621
        %623 = vadd.xlane.f32.xlu0 %v618
        %v624 = vpop.xlane.xlu0 %623
        %v625 = vmul.f32 %v622, %v249
        %v626 = vmul.f32 %v624, %v249
        %v627 = vmul.f32 %v615, %v615
        %v628 = vmul.f32 %v618, %v618
        %629 = vadd.xlane.f32.xlu0 %v627
        %v630 = vpop.xlane.xlu0 %629
        %631 = vadd.xlane.f32.xlu0 %v628
        %v632 = vpop.xlane.xlu0 %631
        %v633 = vmul.f32 %v630, %v249
        %v634 = vmul.f32 %v632, %v249
        %v635 = vmul.f32 %v625, %v625
        %v636 = vmul.f32 %v626, %v626
        %v637 = vsub.f32 %v633, %v635
        %v638 = vsub.f32 %v634, %v636
        %v639 = vadd.f32 %v637, 1e-05
        %v640 = vadd.f32 %v638, 1e-05
        %v641 = vrsqrt.pop %v639
        %v642 = vrsqrt.pop %v640
        %v643 = vmul.f32 %v239, %v641
        %v644 = vmul.f32 %v240, %v642
        %646 = vset.pattern.permute.xlu0 2
        %647 = vperm.xlu0 %646, %v643
        %v648 = vpop.permute.xlu0 %647
        %651 = vset.pattern.permute.xlu0 2
        %652 = vperm.xlu0 %651, %v644
        %v653 = vpop.permute.xlu0 %652
        %v655 = vmul.f32 %v648, %v615
        %v656 = vmul.f32 %v653, %v618
        %v657 = vmul.f32 %v643, %v625
        %v658 = vmul.f32 %v644, %v626
        %661 = vrot.lane.b32.xlu0 %v657, 1
        %v662 = vpop.permute.xlu0 %661
        %663 = vrot.lane.b32.xlu0 %v658, 1
        %v664 = vpop.permute.xlu0 %663
        %v667 = vsub.f32 %v239, %v662
        %v668 = vsub.f32 %v240, %v664
        %670 = vset.pattern.permute.xlu0 3
        %671 = vperm.xlu0 %670, %v667
        %v672 = vpop.permute.xlu0 %671
        %675 = vset.pattern.permute.xlu0 3
        %676 = vperm.xlu0 %675, %v668
        %v677 = vpop.permute.xlu0 %676
        %v679 = vadd.f32 %v655, %v672
        %v680 = vadd.f32 %v656, %v677
        %681 = vset.pattern.permute.xlu0 4
        %682 = vperm.xlu0 %681, %v241
        %v683 = vpop.permute.xlu0 %682
        %685 = vset.pattern.permute.xlu0 4
        %686 = vperm.xlu0 %685, %v242
        %v687 = vpop.permute.xlu0 %686
        %v689 = vmul.f32 %v683, %v679
        %v690 = vmul.f32 %v687, %v680
        %v691 = vand.u32 2147483647, %v689
        %vm692 = vcmp.le.f32.partialorder %v691, 0.7853982
        %vm693 = vcmp.lt.s32.totalorder %v689, 0
        %v694 = vand.u32 %v689, 2139095040
        %v695 = vshrl.u32 %v694, 23
        %v696 = vsub.s32 %v695, 127
        %v697 = vand.u32 2147483647, %v689
        %v698 = vand.u32 %v697, 8388607
        %v699 = vor.u32 %v698, 8388608
        %v700 = vsub.s32 0, %v699
        %v701 = vadd.s32 %v696, 1
        %vm702 = vcmp.gt.s32.totalorder %v701, 0
        %v703 = vsel %vm702, %v701, 0
        %v704 = vshrl.u32 %v703, 5
        %v705 = vand.u32 %v703, 31
        %v706 = vsub.s32 32, %v705
        %v707 = vshrl.u32 683565275, %v706
        %v708 = vshll.u32 683565275, %v705
        %v709 = vshrl.u32 2475754826, %v706
        %v710 = vor.u32 %v708, %v709
        %v711 = vshll.u32 2475754826, %v705
        %v712 = vshrl.u32 2131351028, %v706
        %v713 = vor.u32 %v711, %v712
        %v714 = vshll.u32 2131351028, %v705
        %v715 = vshrl.u32 2102212464, %v706
        %v716 = vor.u32 %v714, %v715
        %v717 = vshll.u32 2102212464, %v705
        %v718 = vshrl.u32 920167782, %v706
        %v719 = vor.u32 %v717, %v718
        %v720 = vshll.u32 920167782, %v705
        %v721 = vshrl.u32 1326507024, %v706
        %v722 = vor.u32 %v720, %v721
        %vm723 = vcmp.lt.s32.totalorder %v704, 1
        %vm724 = vcmp.lt.s32.totalorder %v704, 2
        %vm725 = vcmp.lt.s32.totalorder %v704, 3
        %vm726 = vcmp.lt.s32.totalorder %v704, 4
        %v727 = vsel %vm723, %v707, %v710
        %v728 = vsel %vm726, %v716, 2102212464
        %v729 = vsel %vm725, %v713, %v728
        %v730 = vsel %vm724, %v727, %v729
        %v731 = vsel %vm723, %v710, %v713
        %v732 = vsel %vm726, %v719, 920167782
        %v733 = vsel %vm725, %v716, %v732
        %v734 = vsel %vm724, %v731, %v733
        %v735 = vsel %vm723, %v713, %v716
        %v736 = vsel %vm726, %v722, 1326507024
        %v737 = vsel %vm725, %v719, %v736
        %v738 = vsel %vm724, %v735, %v737
        %v739 = vshll.u32 %v699, 8
        %v740 = vmul.u32.u64.compose %v739, %v738
        %v741 = vextract.low.u32 %v740
        %v742 = vextract.high.u32 %v740
        %v743 = vmul.u32.u64.compose %v739, %v734
        %v744 = vextract.low.u32 %v743
        %v745 = vextract.high.u32 %v743
        %v746 = vmul.u32 %v739, %v730
        %v747 = vadd.s32 %v742, %v744
        %vm748 = vc.u32 %v742, %v744
        %v749 = vadd.s32 %v745, 1
        %v750 = vsel %vm748, %v749, %v745
        %v751 = vadd.s32 %v746, %v750
        %v752 = vadd.s32 %v751, 536870912
        %v753 = vshrl.u32 %v752, 30
        %v754 = vshll.u32 %v753, 30
        %v755 = vsub.s32 %v751, %v754
        %vm756 = vcmp.lt.s32.totalorder %v755, 0
        %v757 = vsub.s32 0, %v755
        %v758 = vsel %vm756, %v757, %v755
        %v759 = vclz %v758
        %v760 = vsub.s32 %v759, 2
        %vm761 = vcmp.gt.s32.totalorder 0, %v760
        %v762 = vsel %vm761, 0, %v760
        %v763 = vsub.s32 32, %v762
        %v764 = vshll.u32 %v755, %v762
        %v765 = vshrl.u32 %v747, %v763
        %v766 = vor.u32 %v764, %v765
        %v767 = vsub.s32 4294967266, %v762
        %v768 = vadd.s32 %v767, 127
        %v769 = vshll.u32 %v768, 23
        %v770 = vor.u32 4788187, %v769
        %v771 = vand.u32 2147483647, %v770
        %v773 = vcvt.s32.f32 %v766
        %v774 = vmul.f32 %v773, %v771
        %v775 = vxor.u32 %v774, 2147483648
        %v776 = vsel %vm693, %v775, %v774
        %v777 = vsub.s32 4, %v753
        %v778 = vsel %vm693, %v777, %v753
        %v779 = vsel %vm692, %v689, %v776
        %v780 = vsel %vm692, 0, %v778
        %v781 = vcosq.f32.pop %v779
        %v782 = vsinq.f32.pop %v779
        %vm783 = vweird.f32 %v689
        %v784 = vadd.s32 %v780, 3
        %v785 = vand.u32 %v784, 3
        %vm786 = vcmp.lt.s32.totalorder %v785, 2
        %vm787 = vcmp.eq.s32.totalorder %v785, 0
        %v788 = vxor.u32 %v782, 2147483648
        %v789 = vsel %vm787, %v781, %v788
        %vm790 = vcmp.eq.s32.totalorder %v785, 2
        %v791 = vxor.u32 %v781, 2147483648
        %v792 = vsel %vm790, %v791, %v782
        %v793 = vsel %vm786, %v789, %v792
        %v794 = vsel %vm783, nan, %v793
        %v795 = vand.u32 2147483647, %v690
        %vm796 = vcmp.le.f32.partialorder %v795, 0.7853982
        %vm797 = vcmp.lt.s32.totalorder %v690, 0
        %v798 = vand.u32 %v690, 2139095040
        %v799 = vshrl.u32 %v798, 23
        %v800 = vsub.s32 %v799, 127
        %v801 = vand.u32 2147483647, %v690
        %v802 = vand.u32 %v801, 8388607
        %v803 = vor.u32 %v802, 8388608
        %v804 = vsub.s32 0, %v803
        %v805 = vadd.s32 %v800, 1
        %vm806 = vcmp.gt.s32.totalorder %v805, 0
        %v807 = vsel %vm806, %v805, 0
        %v808 = vshrl.u32 %v807, 5
        %v809 = vand.u32 %v807, 31
        %v810 = vsub.s32 32, %v809
        %v811 = vshrl.u32 683565275, %v810
        %v812 = vshll.u32 683565275, %v809
        %v813 = vshrl.u32 2475754826, %v810
        %v814 = vor.u32 %v812, %v813
        %v815 = vshll.u32 2475754826, %v809
        %v816 = vshrl.u32 2131351028, %v810
        %v817 = vor.u32 %v815, %v816
        %v818 = vshll.u32 2131351028, %v809
        %v819 = vshrl.u32 2102212464, %v810
        %v820 = vor.u32 %v818, %v819
        %v821 = vshll.u32 2102212464, %v809
        %v822 = vshrl.u32 920167782, %v810
        %v823 = vor.u32 %v821, %v822
        %v824 = vshll.u32 920167782, %v809
        %v825 = vshrl.u32 1326507024, %v810
        %v826 = vor.u32 %v824, %v825
        %vm827 = vcmp.lt.s32.totalorder %v808, 1
        %vm828 = vcmp.lt.s32.totalorder %v808, 2
        %vm829 = vcmp.lt.s32.totalorder %v808, 3
        %vm830 = vcmp.lt.s32.totalorder %v808, 4
        %v831 = vsel %vm827, %v811, %v814
        %v832 = vsel %vm830, %v820, 2102212464
        %v833 = vsel %vm829, %v817, %v832
        %v834 = vsel %vm828, %v831, %v833
        %v835 = vsel %vm827, %v814, %v817
        %v836 = vsel %vm830, %v823, 920167782
        %v837 = vsel %vm829, %v820, %v836
        %v838 = vsel %vm828, %v835, %v837
        %v839 = vsel %vm827, %v817, %v820
        %v840 = vsel %vm830, %v826, 1326507024
        %v841 = vsel %vm829, %v823, %v840
        %v842 = vsel %vm828, %v839, %v841
        %v843 = vshll.u32 %v803, 8
        %v844 = vmul.u32.u64.compose %v843, %v842
        %v845 = vextract.low.u32 %v844
        %v846 = vextract.high.u32 %v844
        %v847 = vmul.u32.u64.compose %v843, %v838
        %v848 = vextract.low.u32 %v847
        %v849 = vextract.high.u32 %v847
        %v850 = vmul.u32 %v843, %v834
        %v851 = vadd.s32 %v846, %v848
        %vm852 = vc.u32 %v846, %v848
        %v853 = vadd.s32 %v849, 1
        %v854 = vsel %vm852, %v853, %v849
        %v855 = vadd.s32 %v850, %v854
        %v856 = vadd.s32 %v855, 536870912
        %v857 = vshrl.u32 %v856, 30
        %v858 = vshll.u32 %v857, 30
        %v859 = vsub.s32 %v855, %v858
        %vm860 = vcmp.lt.s32.totalorder %v859, 0
        %v861 = vsub.s32 0, %v859
        %v862 = vsel %vm860, %v861, %v859
        %v863 = vclz %v862
        %v864 = vsub.s32 %v863, 2
        %vm865 = vcmp.gt.s32.totalorder 0, %v864
        %v866 = vsel %vm865, 0, %v864
        %v867 = vsub.s32 32, %v866
        %v868 = vshll.u32 %v859, %v866
        %v869 = vshrl.u32 %v851, %v867
        %v870 = vor.u32 %v868, %v869
        %v871 = vsub.s32 4294967266, %v866
        %v872 = vadd.s32 %v871, 127
        %v873 = vshll.u32 %v872, 23
        %v874 = vor.u32 4788187, %v873
        %v875 = vand.u32 2147483647, %v874
        %v877 = vcvt.s32.f32 %v870
        %v878 = vmul.f32 %v877, %v875
        %v879 = vxor.u32 %v878, 2147483648
        %v880 = vsel %vm797, %v879, %v878
        %v881 = vsub.s32 4, %v857
        %v882 = vsel %vm797, %v881, %v857
        %v883 = vsel %vm796, %v690, %v880
        %v884 = vsel %vm796, 0, %v882
        %v885 = vcosq.f32.pop %v883
        %v886 = vsinq.f32.pop %v883
        %vm887 = vweird.f32 %v690
        %v888 = vadd.s32 %v884, 3
        %v889 = vand.u32 %v888, 3
        %vm890 = vcmp.lt.s32.totalorder %v889, 2
        %vm891 = vcmp.eq.s32.totalorder %v889, 0
        %v892 = vxor.u32 %v886, 2147483648
        %v893 = vsel %vm891, %v885, %v892
        %vm894 = vcmp.eq.s32.totalorder %v889, 2
        %v895 = vxor.u32 %v885, 2147483648
        %v896 = vsel %vm894, %v895, %v886
        %v897 = vsel %vm890, %v893, %v896
        %v898 = vsel %vm887, nan, %v897
        %v899 = vmul.f32 %v794, %v794
        %v900 = vmul.f32 %v898, %v898
        %901 = vset.pattern.permute.xlu0 5
        %902 = vperm.xlu0 %901, %v241
        %v903 = vpop.permute.xlu0 %902
        %905 = vset.pattern.permute.xlu0 5
        %906 = vperm.xlu0 %905, %v242
        %v907 = vpop.permute.xlu0 %906
        %v909 = vmul.f32 %v903, %v899
        %v910 = vmul.f32 %v907, %v900
        %v911 = vadd.f32 %v679, %v909
        %v912 = vadd.f32 %v680, %v910
        %s913 = scalar_lea.vmem %s3, 8
        %v914 = vld [vmem:[%s913] sm:$0xf]
        %v915 = vld [vmem:[%s913 + $0x4] sm:$0xf]
        %916 = vrot.lane.b32.xlu0 %v911, 1
        %v917 = vpop.permute.xlu0 %916
        %918 = vrot.lane.b32.xlu0 %v912, 1
        %v919 = vpop.permute.xlu0 %918
        %v920 = vsel %vm548, %v917, 0.0
        %v921 = vsel %vm548, %v919, 0.0
        %922 = vrot.lane.b32.xlu0 %v911, 127
        %v923 = vpop.permute.xlu0 %922
        %924 = vrot.lane.b32.xlu0 %v912, 127
        %v925 = vpop.permute.xlu0 %924
        %v926 = vsel %vm557, %v923, 0.0
        %v927 = vsel %vm557, %v925, 0.0
        %v928 = vpack.c.bf16 %v921, %v920
        %v929 = vpack.c.bf16 %v912, %v911
        %v930 = vpack.c.bf16 %v927, %v926
        %931 = vset.pattern.permute.xlu0 1
        %932 = vperm.xlu0 %931, %v241
        %v933 = vpop.permute.xlu0 %932
        %935 = vset.pattern.permute.xlu0 1
        %936 = vperm.xlu0 %935, %v242
        %v937 = vpop.permute.xlu0 %936
        %v941 = vunpack.c.l.b16 %v914
        %v942 = vunpack.c.l.b16 %v915
        %v943 = vpack.c.b16 %v942, %v941
        %v945 = vsel %vm576, %v943, 0
        %947 = vmatprep.subr.bf16.mxu0 0
        %948 = vmatpush1.bf16.msra.mxu0 %v928
        %949 = vmatprep.subr.bf16.mxu0 0
        %950 = vmatpush1.bf16.msra.mxu0 %v929
        %951 = vmatprep.subr.bf16.mxu0 0
        %952 = vmatpush1.bf16.msra.mxu0 %v930
        %953 = vmatprep.subr.bf16.mxu0 0
        %954 = vmatpush1.bf16.msra.mxu0 0
        %955 = vmatprep.subr.bf16.mxu0 0
        %956 = vmatpush1.bf16.msra.mxu0 0
        %957 = vmatprep.subr.bf16.mxu0 0
        %958 = vmatpush1.bf16.msra.mxu0 0
        %959 = vmatprep.subr.bf16.mxu0 0
        %960 = vmatpush1.bf16.msra.mxu0 0
        %961 = vmatprep.subr.bf16.mxu0 0
        %962 = vmatpush1.bf16.msra.mxu0 0
        %963 = vmatprep.subr.bf16.mxu0 0
        %964 = vmatpush1.bf16.msra.mxu0 0
        %965 = vmatprep.subr.bf16.mxu0 0
        %966 = vmatpush1.bf16.msra.mxu0 0
        %967 = vmatprep.subr.bf16.mxu0 0
        %968 = vmatpush1.bf16.msra.mxu0 0
        %969 = vmatprep.subr.bf16.mxu0 0
        %970 = vmatpush1.bf16.msra.mxu0 0
        %971 = vmatprep.subr.bf16.mxu0 0
        %972 = vmatpush1.bf16.msra.mxu0 0
        %973 = vmatprep.subr.bf16.mxu0 0
        %974 = vmatpush1.bf16.msra.mxu0 0
        %975 = vmatprep.subr.bf16.mxu0 0
        %976 = vmatpush1.bf16.msra.mxu0 0
        %977 = vmatprep.subr.bf16.mxu0 0
        %978 = vmatpush1.bf16.msra.mxu0 0
        %979 = vmatprep.mubr.bf16.mxu0 0
        %980 = vmatmul.mubr.bf16.gmra.mrb[0].mxu0 %v945
        %v981 = vpop.f32.mrb[0].mxu0
        %v982 = vadd.f32 %v933, %v981
        %v983 = vpop.f32.mrb[0].mxu0
        %v984 = vpop.f32.mrb[0].mxu0
        %v985 = vadd.f32 %v937, %v984
        %v986 = vpop.f32.mrb[0].mxu0
        %987 = vdwg.mxu0
        %v988 = vadd.f32 %v237, %v982
        %v989 = vadd.f32 %v238, %v985
        %990 = vadd.xlane.f32.xlu0 %v988
        %v991 = vpop.xlane.xlu0 %990
        %992 = vadd.xlane.f32.xlu0 %v989
        %v993 = vpop.xlane.xlu0 %992
        %v994 = vmul.f32 %v991, %v249
        %v995 = vmul.f32 %v993, %v249
        %v996 = vmul.f32 %v988, %v988
        %v997 = vmul.f32 %v989, %v989
        %998 = vadd.xlane.f32.xlu0 %v996
        %v999 = vpop.xlane.xlu0 %998
        %1000 = vadd.xlane.f32.xlu0 %v997
        %v1001 = vpop.xlane.xlu0 %1000
        %v1002 = vmul.f32 %v999, %v249
        %v1003 = vmul.f32 %v1001, %v249
        %v1004 = vmul.f32 %v994, %v994
        %v1005 = vmul.f32 %v995, %v995
        %v1006 = vsub.f32 %v1002, %v1004
        %v1007 = vsub.f32 %v1003, %v1005
        %v1008 = vadd.f32 %v1006, 1e-05
        %v1009 = vadd.f32 %v1007, 1e-05
        %v1010 = vrsqrt.pop %v1008
        %v1011 = vrsqrt.pop %v1009
        %v1012 = vmul.f32 %v239, %v1010
        %v1013 = vmul.f32 %v240, %v1011
        %1015 = vset.pattern.permute.xlu0 4
        %1016 = vperm.xlu0 %1015, %v1012
        %v1017 = vpop.permute.xlu0 %1016
        %1020 = vset.pattern.permute.xlu0 4
        %1021 = vperm.xlu0 %1020, %v1013
        %v1022 = vpop.permute.xlu0 %1021
        %v1024 = vmul.f32 %v1017, %v988
        %v1025 = vmul.f32 %v1022, %v989
        %v1026 = vmul.f32 %v1012, %v994
        %v1027 = vmul.f32 %v1013, %v995
        %1030 = vrot.lane.b32.xlu0 %v1026, 1
        %v1031 = vpop.permute.xlu0 %1030
        %1032 = vrot.lane.b32.xlu0 %v1027, 1
        %v1033 = vpop.permute.xlu0 %1032
        %v1036 = vsub.f32 %v239, %v1031
        %v1037 = vsub.f32 %v240, %v1033
        %1039 = vset.pattern.permute.xlu0 5
        %1040 = vperm.xlu0 %1039, %v1036
        %v1041 = vpop.permute.xlu0 %1040
        %1044 = vset.pattern.permute.xlu0 5
        %1045 = vperm.xlu0 %1044, %v1037
        %v1046 = vpop.permute.xlu0 %1045
        %v1048 = vadd.f32 %v1024, %v1041
        %v1049 = vadd.f32 %v1025, %v1046
        %1050 = vset.pattern.permute.xlu0 8
        %1051 = vperm.xlu0 %1050, %v241
        %v1052 = vpop.permute.xlu0 %1051
        %1054 = vset.pattern.permute.xlu0 8
        %1055 = vperm.xlu0 %1054, %v242
        %v1056 = vpop.permute.xlu0 %1055
        %v1058 = vmul.f32 %v1052, %v1048
        %v1059 = vmul.f32 %v1056, %v1049
        %v1060 = vand.u32 2147483647, %v1058
        %vm1061 = vcmp.le.f32.partialorder %v1060, 0.7853982
        %vm1062 = vcmp.lt.s32.totalorder %v1058, 0
        %v1063 = vand.u32 %v1058, 2139095040
        %v1064 = vshrl.u32 %v1063, 23
        %v1065 = vsub.s32 %v1064, 127
        %v1066 = vand.u32 2147483647, %v1058
        %v1067 = vand.u32 %v1066, 8388607
        %v1068 = vor.u32 %v1067, 8388608
        %v1069 = vsub.s32 0, %v1068
        %v1070 = vadd.s32 %v1065, 1
        %vm1071 = vcmp.gt.s32.totalorder %v1070, 0
        %v1072 = vsel %vm1071, %v1070, 0
        %v1073 = vshrl.u32 %v1072, 5
        %v1074 = vand.u32 %v1072, 31
        %v1075 = vsub.s32 32, %v1074
        %v1076 = vshrl.u32 683565275, %v1075
        %v1077 = vshll.u32 683565275, %v1074
        %v1078 = vshrl.u32 2475754826, %v1075
        %v1079 = vor.u32 %v1077, %v1078
        %v1080 = vshll.u32 2475754826, %v1074
        %v1081 = vshrl.u32 2131351028, %v1075
        %v1082 = vor.u32 %v1080, %v1081
        %v1083 = vshll.u32 2131351028, %v1074
        %v1084 = vshrl.u32 2102212464, %v1075
        %v1085 = vor.u32 %v1083, %v1084
        %v1086 = vshll.u32 2102212464, %v1074
        %v1087 = vshrl.u32 920167782, %v1075
        %v1088 = vor.u32 %v1086, %v1087
        %v1089 = vshll.u32 920167782, %v1074
        %v1090 = vshrl.u32 1326507024, %v1075
        %v1091 = vor.u32 %v1089, %v1090
        %vm1092 = vcmp.lt.s32.totalorder %v1073, 1
        %vm1093 = vcmp.lt.s32.totalorder %v1073, 2
        %vm1094 = vcmp.lt.s32.totalorder %v1073, 3
        %vm1095 = vcmp.lt.s32.totalorder %v1073, 4
        %v1096 = vsel %vm1092, %v1076, %v1079
        %v1097 = vsel %vm1095, %v1085, 2102212464
        %v1098 = vsel %vm1094, %v1082, %v1097
        %v1099 = vsel %vm1093, %v1096, %v1098
        %v1100 = vsel %vm1092, %v1079, %v1082
        %v1101 = vsel %vm1095, %v1088, 920167782
        %v1102 = vsel %vm1094, %v1085, %v1101
        %v1103 = vsel %vm1093, %v1100, %v1102
        %v1104 = vsel %vm1092, %v1082, %v1085
        %v1105 = vsel %vm1095, %v1091, 1326507024
        %v1106 = vsel %vm1094, %v1088, %v1105
        %v1107 = vsel %vm1093, %v1104, %v1106
        %v1108 = vshll.u32 %v1068, 8
        %v1109 = vmul.u32.u64.compose %v1108, %v1107
        %v1110 = vextract.low.u32 %v1109
        %v1111 = vextract.high.u32 %v1109
        %v1112 = vmul.u32.u64.compose %v1108, %v1103
        %v1113 = vextract.low.u32 %v1112
        %v1114 = vextract.high.u32 %v1112
        %v1115 = vmul.u32 %v1108, %v1099
        %v1116 = vadd.s32 %v1111, %v1113
        %vm1117 = vc.u32 %v1111, %v1113
        %v1118 = vadd.s32 %v1114, 1
        %v1119 = vsel %vm1117, %v1118, %v1114
        %v1120 = vadd.s32 %v1115, %v1119
        %v1121 = vadd.s32 %v1120, 536870912
        %v1122 = vshrl.u32 %v1121, 30
        %v1123 = vshll.u32 %v1122, 30
        %v1124 = vsub.s32 %v1120, %v1123
        %vm1125 = vcmp.lt.s32.totalorder %v1124, 0
        %v1126 = vsub.s32 0, %v1124
        %v1127 = vsel %vm1125, %v1126, %v1124
        %v1128 = vclz %v1127
        %v1129 = vsub.s32 %v1128, 2
        %vm1130 = vcmp.gt.s32.totalorder 0, %v1129
        %v1131 = vsel %vm1130, 0, %v1129
        %v1132 = vsub.s32 32, %v1131
        %v1133 = vshll.u32 %v1124, %v1131
        %v1134 = vshrl.u32 %v1116, %v1132
        %v1135 = vor.u32 %v1133, %v1134
        %v1136 = vsub.s32 4294967266, %v1131
        %v1137 = vadd.s32 %v1136, 127
        %v1138 = vshll.u32 %v1137, 23
        %v1139 = vor.u32 4788187, %v1138
        %v1140 = vand.u32 2147483647, %v1139
        %v1142 = vcvt.s32.f32 %v1135
        %v1143 = vmul.f32 %v1142, %v1140
        %v1144 = vxor.u32 %v1143, 2147483648
        %v1145 = vsel %vm1062, %v1144, %v1143
        %v1146 = vsub.s32 4, %v1122
        %v1147 = vsel %vm1062, %v1146, %v1122
        %v1148 = vsel %vm1061, %v1058, %v1145
        %v1149 = vsel %vm1061, 0, %v1147
        %v1150 = vcosq.f32.pop %v1148
        %v1151 = vsinq.f32.pop %v1148
        %vm1152 = vweird.f32 %v1058
        %v1153 = vadd.s32 %v1149, 3
        %v1154 = vand.u32 %v1153, 3
        %vm1155 = vcmp.lt.s32.totalorder %v1154, 2
        %vm1156 = vcmp.eq.s32.totalorder %v1154, 0
        %v1157 = vxor.u32 %v1151, 2147483648
        %v1158 = vsel %vm1156, %v1150, %v1157
        %vm1159 = vcmp.eq.s32.totalorder %v1154, 2
        %v1160 = vxor.u32 %v1150, 2147483648
        %v1161 = vsel %vm1159, %v1160, %v1151
        %v1162 = vsel %vm1155, %v1158, %v1161
        %v1163 = vsel %vm1152, nan, %v1162
        %v1164 = vand.u32 2147483647, %v1059
        %vm1165 = vcmp.le.f32.partialorder %v1164, 0.7853982
        %vm1166 = vcmp.lt.s32.totalorder %v1059, 0
        %v1167 = vand.u32 %v1059, 2139095040
        %v1168 = vshrl.u32 %v1167, 23
        %v1169 = vsub.s32 %v1168, 127
        %v1170 = vand.u32 2147483647, %v1059
        %v1171 = vand.u32 %v1170, 8388607
        %v1172 = vor.u32 %v1171, 8388608
        %v1173 = vsub.s32 0, %v1172
        %v1174 = vadd.s32 %v1169, 1
        %vm1175 = vcmp.gt.s32.totalorder %v1174, 0
        %v1176 = vsel %vm1175, %v1174, 0
        %v1177 = vshrl.u32 %v1176, 5
        %v1178 = vand.u32 %v1176, 31
        %v1179 = vsub.s32 32, %v1178
        %v1180 = vshrl.u32 683565275, %v1179
        %v1181 = vshll.u32 683565275, %v1178
        %v1182 = vshrl.u32 2475754826, %v1179
        %v1183 = vor.u32 %v1181, %v1182
        %v1184 = vshll.u32 2475754826, %v1178
        %v1185 = vshrl.u32 2131351028, %v1179
        %v1186 = vor.u32 %v1184, %v1185
        %v1187 = vshll.u32 2131351028, %v1178
        %v1188 = vshrl.u32 2102212464, %v1179
        %v1189 = vor.u32 %v1187, %v1188
        %v1190 = vshll.u32 2102212464, %v1178
        %v1191 = vshrl.u32 920167782, %v1179
        %v1192 = vor.u32 %v1190, %v1191
        %v1193 = vshll.u32 920167782, %v1178
        %v1194 = vshrl.u32 1326507024, %v1179
        %v1195 = vor.u32 %v1193, %v1194
        %vm1196 = vcmp.lt.s32.totalorder %v1177, 1
        %vm1197 = vcmp.lt.s32.totalorder %v1177, 2
        %vm1198 = vcmp.lt.s32.totalorder %v1177, 3
        %vm1199 = vcmp.lt.s32.totalorder %v1177, 4
        %v1200 = vsel %vm1196, %v1180, %v1183
        %v1201 = vsel %vm1199, %v1189, 2102212464
        %v1202 = vsel %vm1198, %v1186, %v1201
        %v1203 = vsel %vm1197, %v1200, %v1202
        %v1204 = vsel %vm1196, %v1183, %v1186
        %v1205 = vsel %vm1199, %v1192, 920167782
        %v1206 = vsel %vm1198, %v1189, %v1205
        %v1207 = vsel %vm1197, %v1204, %v1206
        %v1208 = vsel %vm1196, %v1186, %v1189
        %v1209 = vsel %vm1199, %v1195, 1326507024
        %v1210 = vsel %vm1198, %v1192, %v1209
        %v1211 = vsel %vm1197, %v1208, %v1210
        %v1212 = vshll.u32 %v1172, 8
        %v1213 = vmul.u32.u64.compose %v1212, %v1211
        %v1214 = vextract.low.u32 %v1213
        %v1215 = vextract.high.u32 %v1213
        %v1216 = vmul.u32.u64.compose %v1212, %v1207
        %v1217 = vextract.low.u32 %v1216
        %v1218 = vextract.high.u32 %v1216
        %v1219 = vmul.u32 %v1212, %v1203
        %v1220 = vadd.s32 %v1215, %v1217
        %vm1221 = vc.u32 %v1215, %v1217
        %v1222 = vadd.s32 %v1218, 1
        %v1223 = vsel %vm1221, %v1222, %v1218
        %v1224 = vadd.s32 %v1219, %v1223
        %v1225 = vadd.s32 %v1224, 536870912
        %v1226 = vshrl.u32 %v1225, 30
        %v1227 = vshll.u32 %v1226, 30
        %v1228 = vsub.s32 %v1224, %v1227
        %vm1229 = vcmp.lt.s32.totalorder %v1228, 0
        %v1230 = vsub.s32 0, %v1228
        %v1231 = vsel %vm1229, %v1230, %v1228
        %v1232 = vclz %v1231
        %v1233 = vsub.s32 %v1232, 2
        %vm1234 = vcmp.gt.s32.totalorder 0, %v1233
        %v1235 = vsel %vm1234, 0, %v1233
        %v1236 = vsub.s32 32, %v1235
        %v1237 = vshll.u32 %v1228, %v1235
        %v1238 = vshrl.u32 %v1220, %v1236
        %v1239 = vor.u32 %v1237, %v1238
        %v1240 = vsub.s32 4294967266, %v1235
        %v1241 = vadd.s32 %v1240, 127
        %v1242 = vshll.u32 %v1241, 23
        %v1243 = vor.u32 4788187, %v1242
        %v1244 = vand.u32 2147483647, %v1243
        %v1246 = vcvt.s32.f32 %v1239
        %v1247 = vmul.f32 %v1246, %v1244
        %v1248 = vxor.u32 %v1247, 2147483648
        %v1249 = vsel %vm1166, %v1248, %v1247
        %v1250 = vsub.s32 4, %v1226
        %v1251 = vsel %vm1166, %v1250, %v1226
        %v1252 = vsel %vm1165, %v1059, %v1249
        %v1253 = vsel %vm1165, 0, %v1251
        %v1254 = vcosq.f32.pop %v1252
        %v1255 = vsinq.f32.pop %v1252
        %vm1256 = vweird.f32 %v1059
        %v1257 = vadd.s32 %v1253, 3
        %v1258 = vand.u32 %v1257, 3
        %vm1259 = vcmp.lt.s32.totalorder %v1258, 2
        %vm1260 = vcmp.eq.s32.totalorder %v1258, 0
        %v1261 = vxor.u32 %v1255, 2147483648
        %v1262 = vsel %vm1260, %v1254, %v1261
        %vm1263 = vcmp.eq.s32.totalorder %v1258, 2
        %v1264 = vxor.u32 %v1254, 2147483648
        %v1265 = vsel %vm1263, %v1264, %v1255
        %v1266 = vsel %vm1259, %v1262, %v1265
        %v1267 = vsel %vm1256, nan, %v1266
        %v1268 = vmul.f32 %v1163, %v1163
        %v1269 = vmul.f32 %v1267, %v1267
        %1270 = vset.pattern.permute.xlu0 9
        %1271 = vperm.xlu0 %1270, %v241
        %v1272 = vpop.permute.xlu0 %1271
        %1274 = vset.pattern.permute.xlu0 9
        %1275 = vperm.xlu0 %1274, %v242
        %v1276 = vpop.permute.xlu0 %1275
        %v1278 = vmul.f32 %v1272, %v1268
        %v1279 = vmul.f32 %v1276, %v1269
        %v1280 = vadd.f32 %v1048, %v1278
        %v1281 = vadd.f32 %v1049, %v1279
        %s1282 = scalar_lea.vmem %s3, 16
        %v1283 = vld [vmem:[%s1282] sm:$0xf]
        %v1284 = vld [vmem:[%s1282 + $0x4] sm:$0xf]
        %1285 = vrot.lane.b32.xlu0 %v1280, 3
        %v1286 = vpop.permute.xlu0 %1285
        %1287 = vrot.lane.b32.xlu0 %v1281, 3
        %v1288 = vpop.permute.xlu0 %1287
        %vm1289 = vcmp.ge.s32.totalorder %v244, 3
        %vm1290 = vcmp.lt.s32.totalorder %v244, 131
        %vm1291 = vmand %vm1289, %vm1290
        %v1292 = vsel %vm1291, %v1286, 0.0
        %v1293 = vsel %vm1291, %v1288, 0.0
        %1294 = vrot.lane.b32.xlu0 %v1280, 125
        %v1295 = vpop.permute.xlu0 %1294
        %1296 = vrot.lane.b32.xlu0 %v1281, 125
        %v1297 = vpop.permute.xlu0 %1296
        %vm1298 = vcmp.ge.s32.totalorder %v244, 4294967293
        %vm1299 = vcmp.lt.s32.totalorder %v244, 125
        %vm1300 = vmand %vm1298, %vm1299
        %v1301 = vsel %vm1300, %v1295, 0.0
        %v1302 = vsel %vm1300, %v1297, 0.0
        %v1303 = vpack.c.bf16 %v1293, %v1292
        %v1304 = vpack.c.bf16 %v1281, %v1280
        %v1305 = vpack.c.bf16 %v1302, %v1301
        %1306 = vset.pattern.permute.xlu0 6
        %1307 = vperm.xlu0 %1306, %v241
        %v1308 = vpop.permute.xlu0 %1307
        %1310 = vset.pattern.permute.xlu0 6
        %1311 = vperm.xlu0 %1310, %v242
        %v1312 = vpop.permute.xlu0 %1311
        %v1316 = vunpack.c.l.b16 %v1283
        %v1317 = vunpack.c.l.b16 %v1284
        %v1318 = vpack.c.b16 %v1317, %v1316
        %v1320 = vsel %vm576, %v1318, 0
        %1322 = vmatprep.subr.bf16.mxu0 0
        %1323 = vmatpush1.bf16.msra.mxu0 %v1303
        %1324 = vmatprep.subr.bf16.mxu0 0
        %1325 = vmatpush1.bf16.msra.mxu0 %v1304
        %1326 = vmatprep.subr.bf16.mxu0 0
        %1327 = vmatpush1.bf16.msra.mxu0 %v1305
        %1328 = vmatprep.subr.bf16.mxu0 0
        %1329 = vmatpush1.bf16.msra.mxu0 0
        %1330 = vmatprep.subr.bf16.mxu0 0
        %1331 = vmatpush1.bf16.msra.mxu0 0
        %1332 = vmatprep.subr.bf16.mxu0 0
        %1333 = vmatpush1.bf16.msra.mxu0 0
        %1334 = vmatprep.subr.bf16.mxu0 0
        %1335 = vmatpush1.bf16.msra.mxu0 0
        %1336 = vmatprep.subr.bf16.mxu0 0
        %1337 = vmatpush1.bf16.msra.mxu0 0
        %1338 = vmatprep.subr.bf16.mxu0 0
        %1339 = vmatpush1.bf16.msra.mxu0 0
        %1340 = vmatprep.subr.bf16.mxu0 0
        %1341 = vmatpush1.bf16.msra.mxu0 0
        %1342 = vmatprep.subr.bf16.mxu0 0
        %1343 = vmatpush1.bf16.msra.mxu0 0
        %1344 = vmatprep.subr.bf16.mxu0 0
        %1345 = vmatpush1.bf16.msra.mxu0 0
        %1346 = vmatprep.subr.bf16.mxu0 0
        %1347 = vmatpush1.bf16.msra.mxu0 0
        %1348 = vmatprep.subr.bf16.mxu0 0
        %1349 = vmatpush1.bf16.msra.mxu0 0
        %1350 = vmatprep.subr.bf16.mxu0 0
        %1351 = vmatpush1.bf16.msra.mxu0 0
        %1352 = vmatprep.subr.bf16.mxu0 0
        %1353 = vmatpush1.bf16.msra.mxu0 0
        %1354 = vmatprep.mubr.bf16.mxu0 0
        %1355 = vmatmul.mubr.bf16.gmra.mrb[0].mxu0 %v1320
        %v1356 = vpop.f32.mrb[0].mxu0
        %v1357 = vadd.f32 %v1308, %v1356
        %v1358 = vpop.f32.mrb[0].mxu0
        %v1359 = vpop.f32.mrb[0].mxu0
        %v1360 = vadd.f32 %v1312, %v1359
        %v1361 = vpop.f32.mrb[0].mxu0
        %1362 = vdwg.mxu0
        %1363 = vadd.xlane.f32.xlu0 %v1357
        %v1364 = vpop.xlane.xlu0 %1363
        %1365 = vadd.xlane.f32.xlu0 %v1360
        %v1366 = vpop.xlane.xlu0 %1365
        %v1367 = vmul.f32 %v1364, %v249
        %v1368 = vmul.f32 %v1366, %v249
        %v1369 = vmul.f32 %v1357, %v1357
        %v1370 = vmul.f32 %v1360, %v1360
        %1371 = vadd.xlane.f32.xlu0 %v1369
        %v1372 = vpop.xlane.xlu0 %1371
        %1373 = vadd.xlane.f32.xlu0 %v1370
        %v1374 = vpop.xlane.xlu0 %1373
        %v1375 = vmul.f32 %v1372, %v249
        %v1376 = vmul.f32 %v1374, %v249
        %v1377 = vmul.f32 %v1367, %v1367
        %v1378 = vmul.f32 %v1368, %v1368
        %v1379 = vsub.f32 %v1375, %v1377
        %v1380 = vsub.f32 %v1376, %v1378
        %v1381 = vadd.f32 %v1379, 1e-05
        %v1382 = vadd.f32 %v1380, 1e-05
        %v1383 = vrsqrt.pop %v1381
        %v1384 = vrsqrt.pop %v1382
        %v1385 = vmul.f32 %v239, %v1383
        %v1386 = vmul.f32 %v240, %v1384
        %1388 = vset.pattern.permute.xlu0 6
        %1389 = vperm.xlu0 %1388, %v1385
        %v1390 = vpop.permute.xlu0 %1389
        %1393 = vset.pattern.permute.xlu0 6
        %1394 = vperm.xlu0 %1393, %v1386
        %v1395 = vpop.permute.xlu0 %1394
        %v1397 = vmul.f32 %v1390, %v1357
        %v1398 = vmul.f32 %v1395, %v1360
        %v1399 = vmul.f32 %v1385, %v1367
        %v1400 = vmul.f32 %v1386, %v1368
        %1403 = vrot.lane.b32.xlu0 %v1399, 1
        %v1404 = vpop.permute.xlu0 %1403
        %1405 = vrot.lane.b32.xlu0 %v1400, 1
        %v1406 = vpop.permute.xlu0 %1405
        %v1409 = vsub.f32 %v239, %v1404
        %v1410 = vsub.f32 %v240, %v1406
        %1412 = vset.pattern.permute.xlu0 7
        %1413 = vperm.xlu0 %1412, %v1409
        %v1414 = vpop.permute.xlu0 %1413
        %1417 = vset.pattern.permute.xlu0 7
        %1418 = vperm.xlu0 %1417, %v1410
        %v1419 = vpop.permute.xlu0 %1418
        %v1421 = vadd.f32 %v1397, %v1414
        %v1422 = vadd.f32 %v1398, %v1419
        %1423 = vset.pattern.permute.xlu0 10
        %1424 = vperm.xlu0 %1423, %v241
        %v1425 = vpop.permute.xlu0 %1424
        %1427 = vset.pattern.permute.xlu0 10
        %1428 = vperm.xlu0 %1427, %v242
        %v1429 = vpop.permute.xlu0 %1428
        %v1431 = vmul.f32 %v1425, %v1421
        %v1432 = vmul.f32 %v1429, %v1422
        %v1433 = vand.u32 2147483647, %v1431
        %vm1434 = vcmp.le.f32.partialorder %v1433, 0.7853982
        %vm1435 = vcmp.lt.s32.totalorder %v1431, 0
        %v1436 = vand.u32 %v1431, 2139095040
        %v1437 = vshrl.u32 %v1436, 23
        %v1438 = vsub.s32 %v1437, 127
        %v1439 = vand.u32 2147483647, %v1431
        %v1440 = vand.u32 %v1439, 8388607
        %v1441 = vor.u32 %v1440, 8388608
        %v1442 = vsub.s32 0, %v1441
        %v1443 = vadd.s32 %v1438, 1
        %vm1444 = vcmp.gt.s32.totalorder %v1443, 0
        %v1445 = vsel %vm1444, %v1443, 0
        %v1446 = vshrl.u32 %v1445, 5
        %v1447 = vand.u32 %v1445, 31
        %v1448 = vsub.s32 32, %v1447
        %v1449 = vshrl.u32 683565275, %v1448
        %v1450 = vshll.u32 683565275, %v1447
        %v1451 = vshrl.u32 2475754826, %v1448
        %v1452 = vor.u32 %v1450, %v1451
        %v1453 = vshll.u32 2475754826, %v1447
        %v1454 = vshrl.u32 2131351028, %v1448
        %v1455 = vor.u32 %v1453, %v1454
        %v1456 = vshll.u32 2131351028, %v1447
        %v1457 = vshrl.u32 2102212464, %v1448
        %v1458 = vor.u32 %v1456, %v1457
        %v1459 = vshll.u32 2102212464, %v1447
        %v1460 = vshrl.u32 920167782, %v1448
        %v1461 = vor.u32 %v1459, %v1460
        %v1462 = vshll.u32 920167782, %v1447
        %v1463 = vshrl.u32 1326507024, %v1448
        %v1464 = vor.u32 %v1462, %v1463
        %vm1465 = vcmp.lt.s32.totalorder %v1446, 1
        %vm1466 = vcmp.lt.s32.totalorder %v1446, 2
        %vm1467 = vcmp.lt.s32.totalorder %v1446, 3
        %vm1468 = vcmp.lt.s32.totalorder %v1446, 4
        %v1469 = vsel %vm1465, %v1449, %v1452
        %v1470 = vsel %vm1468, %v1458, 2102212464
        %v1471 = vsel %vm1467, %v1455, %v1470
        %v1472 = vsel %vm1466, %v1469, %v1471
        %v1473 = vsel %vm1465, %v1452, %v1455
        %v1474 = vsel %vm1468, %v1461, 920167782
        %v1475 = vsel %vm1467, %v1458, %v1474
        %v1476 = vsel %vm1466, %v1473, %v1475
        %v1477 = vsel %vm1465, %v1455, %v1458
        %v1478 = vsel %vm1468, %v1464, 1326507024
        %v1479 = vsel %vm1467, %v1461, %v1478
        %v1480 = vsel %vm1466, %v1477, %v1479
        %v1481 = vshll.u32 %v1441, 8
        %v1482 = vmul.u32.u64.compose %v1481, %v1480
        %v1483 = vextract.low.u32 %v1482
        %v1484 = vextract.high.u32 %v1482
        %v1485 = vmul.u32.u64.compose %v1481, %v1476
        %v1486 = vextract.low.u32 %v1485
        %v1487 = vextract.high.u32 %v1485
        %v1488 = vmul.u32 %v1481, %v1472
        %v1489 = vadd.s32 %v1484, %v1486
        %vm1490 = vc.u32 %v1484, %v1486
        %v1491 = vadd.s32 %v1487, 1
        %v1492 = vsel %vm1490, %v1491, %v1487
        %v1493 = vadd.s32 %v1488, %v1492
        %v1494 = vadd.s32 %v1493, 536870912
        %v1495 = vshrl.u32 %v1494, 30
        %v1496 = vshll.u32 %v1495, 30
        %v1497 = vsub.s32 %v1493, %v1496
        %vm1498 = vcmp.lt.s32.totalorder %v1497, 0
        %v1499 = vsub.s32 0, %v1497
        %v1500 = vsel %vm1498, %v1499, %v1497
        %v1501 = vclz %v1500
        %v1502 = vsub.s32 %v1501, 2
        %vm1503 = vcmp.gt.s32.totalorder 0, %v1502
        %v1504 = vsel %vm1503, 0, %v1502
        %v1505 = vsub.s32 32, %v1504
        %v1506 = vshll.u32 %v1497, %v1504
        %v1507 = vshrl.u32 %v1489, %v1505
        %v1508 = vor.u32 %v1506, %v1507
        %v1509 = vsub.s32 4294967266, %v1504
        %v1510 = vadd.s32 %v1509, 127
        %v1511 = vshll.u32 %v1510, 23
        %v1512 = vor.u32 4788187, %v1511
        %v1513 = vand.u32 2147483647, %v1512
        %v1515 = vcvt.s32.f32 %v1508
        %v1516 = vmul.f32 %v1515, %v1513
        %v1517 = vxor.u32 %v1516, 2147483648
        %v1518 = vsel %vm1435, %v1517, %v1516
        %v1519 = vsub.s32 4, %v1495
        %v1520 = vsel %vm1435, %v1519, %v1495
        %v1521 = vsel %vm1434, %v1431, %v1518
        %v1522 = vsel %vm1434, 0, %v1520
        %v1523 = vcosq.f32.pop %v1521
        %v1524 = vsinq.f32.pop %v1521
        %vm1525 = vweird.f32 %v1431
        %v1526 = vadd.s32 %v1522, 3
        %v1527 = vand.u32 %v1526, 3
        %vm1528 = vcmp.lt.s32.totalorder %v1527, 2
        %vm1529 = vcmp.eq.s32.totalorder %v1527, 0
        %v1530 = vxor.u32 %v1524, 2147483648
        %v1531 = vsel %vm1529, %v1523, %v1530
        %vm1532 = vcmp.eq.s32.totalorder %v1527, 2
        %v1533 = vxor.u32 %v1523, 2147483648
        %v1534 = vsel %vm1532, %v1533, %v1524
        %v1535 = vsel %vm1528, %v1531, %v1534
        %v1536 = vsel %vm1525, nan, %v1535
        %v1537 = vand.u32 2147483647, %v1432
        %vm1538 = vcmp.le.f32.partialorder %v1537, 0.7853982
        %vm1539 = vcmp.lt.s32.totalorder %v1432, 0
        %v1540 = vand.u32 %v1432, 2139095040
        %v1541 = vshrl.u32 %v1540, 23
        %v1542 = vsub.s32 %v1541, 127
        %v1543 = vand.u32 2147483647, %v1432
        %v1544 = vand.u32 %v1543, 8388607
        %v1545 = vor.u32 %v1544, 8388608
        %v1546 = vsub.s32 0, %v1545
        %v1547 = vadd.s32 %v1542, 1
        %vm1548 = vcmp.gt.s32.totalorder %v1547, 0
        %v1549 = vsel %vm1548, %v1547, 0
        %v1550 = vshrl.u32 %v1549, 5
        %v1551 = vand.u32 %v1549, 31
        %v1552 = vsub.s32 32, %v1551
        %v1553 = vshrl.u32 683565275, %v1552
        %v1554 = vshll.u32 683565275, %v1551
        %v1555 = vshrl.u32 2475754826, %v1552
        %v1556 = vor.u32 %v1554, %v1555
        %v1557 = vshll.u32 2475754826, %v1551
        %v1558 = vshrl.u32 2131351028, %v1552
        %v1559 = vor.u32 %v1557, %v1558
        %v1560 = vshll.u32 2131351028, %v1551
        %v1561 = vshrl.u32 2102212464, %v1552
        %v1562 = vor.u32 %v1560, %v1561
        %v1563 = vshll.u32 2102212464, %v1551
        %v1564 = vshrl.u32 920167782, %v1552
        %v1565 = vor.u32 %v1563, %v1564
        %v1566 = vshll.u32 920167782, %v1551
        %v1567 = vshrl.u32 1326507024, %v1552
        %v1568 = vor.u32 %v1566, %v1567
        %vm1569 = vcmp.lt.s32.totalorder %v1550, 1
        %vm1570 = vcmp.lt.s32.totalorder %v1550, 2
        %vm1571 = vcmp.lt.s32.totalorder %v1550, 3
        %vm1572 = vcmp.lt.s32.totalorder %v1550, 4
        %v1573 = vsel %vm1569, %v1553, %v1556
        %v1574 = vsel %vm1572, %v1562, 2102212464
        %v1575 = vsel %vm1571, %v1559, %v1574
        %v1576 = vsel %vm1570, %v1573, %v1575
        %v1577 = vsel %vm1569, %v1556, %v1559
        %v1578 = vsel %vm1572, %v1565, 920167782
        %v1579 = vsel %vm1571, %v1562, %v1578
        %v1580 = vsel %vm1570, %v1577, %v1579
        %v1581 = vsel %vm1569, %v1559, %v1562
        %v1582 = vsel %vm1572, %v1568, 1326507024
        %v1583 = vsel %vm1571, %v1565, %v1582
        %v1584 = vsel %vm1570, %v1581, %v1583
        %v1585 = vshll.u32 %v1545, 8
        %v1586 = vmul.u32.u64.compose %v1585, %v1584
        %v1587 = vextract.low.u32 %v1586
        %v1588 = vextract.high.u32 %v1586
        %v1589 = vmul.u32.u64.compose %v1585, %v1580
        %v1590 = vextract.low.u32 %v1589
        %v1591 = vextract.high.u32 %v1589
        %v1592 = vmul.u32 %v1585, %v1576
        %v1593 = vadd.s32 %v1588, %v1590
        %vm1594 = vc.u32 %v1588, %v1590
        %v1595 = vadd.s32 %v1591, 1
        %v1596 = vsel %vm1594, %v1595, %v1591
        %v1597 = vadd.s32 %v1592, %v1596
        %v1598 = vadd.s32 %v1597, 536870912
        %v1599 = vshrl.u32 %v1598, 30
        %v1600 = vshll.u32 %v1599, 30
        %v1601 = vsub.s32 %v1597, %v1600
        %vm1602 = vcmp.lt.s32.totalorder %v1601, 0
        %v1603 = vsub.s32 0, %v1601
        %v1604 = vsel %vm1602, %v1603, %v1601
        %v1605 = vclz %v1604
        %v1606 = vsub.s32 %v1605, 2
        %vm1607 = vcmp.gt.s32.totalorder 0, %v1606
        %v1608 = vsel %vm1607, 0, %v1606
        %v1609 = vsub.s32 32, %v1608
        %v1610 = vshll.u32 %v1601, %v1608
        %v1611 = vshrl.u32 %v1593, %v1609
        %v1612 = vor.u32 %v1610, %v1611
        %v1613 = vsub.s32 4294967266, %v1608
        %v1614 = vadd.s32 %v1613, 127
        %v1615 = vshll.u32 %v1614, 23
        %v1616 = vor.u32 4788187, %v1615
        %v1617 = vand.u32 2147483647, %v1616
        %v1619 = vcvt.s32.f32 %v1612
        %v1620 = vmul.f32 %v1619, %v1617
        %v1621 = vxor.u32 %v1620, 2147483648
        %v1622 = vsel %vm1539, %v1621, %v1620
        %v1623 = vsub.s32 4, %v1599
        %v1624 = vsel %vm1539, %v1623, %v1599
        %v1625 = vsel %vm1538, %v1432, %v1622
        %v1626 = vsel %vm1538, 0, %v1624
        %v1627 = vcosq.f32.pop %v1625
        %v1628 = vsinq.f32.pop %v1625
        %vm1629 = vweird.f32 %v1432
        %v1630 = vadd.s32 %v1626, 3
        %v1631 = vand.u32 %v1630, 3
        %vm1632 = vcmp.lt.s32.totalorder %v1631, 2
        %vm1633 = vcmp.eq.s32.totalorder %v1631, 0
        %v1634 = vxor.u32 %v1628, 2147483648
        %v1635 = vsel %vm1633, %v1627, %v1634
        %vm1636 = vcmp.eq.s32.totalorder %v1631, 2
        %v1637 = vxor.u32 %v1627, 2147483648
        %v1638 = vsel %vm1636, %v1637, %v1628
        %v1639 = vsel %vm1632, %v1635, %v1638
        %v1640 = vsel %vm1629, nan, %v1639
        %v1641 = vmul.f32 %v1536, %v1536
        %v1642 = vmul.f32 %v1640, %v1640
        %1643 = vset.pattern.permute.xlu0 11
        %1644 = vperm.xlu0 %1643, %v241
        %v1645 = vpop.permute.xlu0 %1644
        %1647 = vset.pattern.permute.xlu0 11
        %1648 = vperm.xlu0 %1647, %v242
        %v1649 = vpop.permute.xlu0 %1648
        %v1651 = vmul.f32 %v1645, %v1641
        %v1652 = vmul.f32 %v1649, %v1642
        %v1653 = vadd.f32 %v1421, %v1651
        %v1654 = vadd.f32 %v1422, %v1652
        %s1655 = scalar_lea.vmem %s3, 24
        %v1656 = vld [vmem:[%s1655] sm:$0xf]
        %v1657 = vld [vmem:[%s1655 + $0x4] sm:$0xf]
        %1658 = vrot.lane.b32.xlu0 %v1653, 1
        %v1659 = vpop.permute.xlu0 %1658
        %1660 = vrot.lane.b32.xlu0 %v1654, 1
        %v1661 = vpop.permute.xlu0 %1660
        %v1662 = vsel %vm548, %v1659, 0.0
        %v1663 = vsel %vm548, %v1661, 0.0
        %1664 = vrot.lane.b32.xlu0 %v1653, 127
        %v1665 = vpop.permute.xlu0 %1664
        %1666 = vrot.lane.b32.xlu0 %v1654, 127
        %v1667 = vpop.permute.xlu0 %1666
        %v1668 = vsel %vm557, %v1665, 0.0
        %v1669 = vsel %vm557, %v1667, 0.0
        %v1670 = vpack.c.bf16 %v1663, %v1662
        %v1671 = vpack.c.bf16 %v1654, %v1653
        %v1672 = vpack.c.bf16 %v1669, %v1668
        %1673 = vset.pattern.permute.xlu0 7
        %1674 = vperm.xlu0 %1673, %v241
        %v1675 = vpop.permute.xlu0 %1674
        %1677 = vset.pattern.permute.xlu0 7
        %1678 = vperm.xlu0 %1677, %v242
        %v1679 = vpop.permute.xlu0 %1678
        %v1683 = vunpack.c.l.b16 %v1656
        %v1684 = vunpack.c.l.b16 %v1657
        %v1685 = vpack.c.b16 %v1684, %v1683
        %v1687 = vsel %vm576, %v1685, 0
        %1689 = vmatprep.subr.bf16.mxu0 0
        %1690 = vmatpush1.bf16.msra.mxu0 %v1670
        %1691 = vmatprep.subr.bf16.mxu0 0
        %1692 = vmatpush1.bf16.msra.mxu0 %v1671
        %1693 = vmatprep.subr.bf16.mxu0 0
        %1694 = vmatpush1.bf16.msra.mxu0 %v1672
        %1695 = vmatprep.subr.bf16.mxu0 0
        %1696 = vmatpush1.bf16.msra.mxu0 0
        %1697 = vmatprep.subr.bf16.mxu0 0
        %1698 = vmatpush1.bf16.msra.mxu0 0
        %1699 = vmatprep.subr.bf16.mxu0 0
        %1700 = vmatpush1.bf16.msra.mxu0 0
        %1701 = vmatprep.subr.bf16.mxu0 0
        %1702 = vmatpush1.bf16.msra.mxu0 0
        %1703 = vmatprep.subr.bf16.mxu0 0
        %1704 = vmatpush1.bf16.msra.mxu0 0
        %1705 = vmatprep.subr.bf16.mxu0 0
        %1706 = vmatpush1.bf16.msra.mxu0 0
        %1707 = vmatprep.subr.bf16.mxu0 0
        %1708 = vmatpush1.bf16.msra.mxu0 0
        %1709 = vmatprep.subr.bf16.mxu0 0
        %1710 = vmatpush1.bf16.msra.mxu0 0
        %1711 = vmatprep.subr.bf16.mxu0 0
        %1712 = vmatpush1.bf16.msra.mxu0 0
        %1713 = vmatprep.subr.bf16.mxu0 0
        %1714 = vmatpush1.bf16.msra.mxu0 0
        %1715 = vmatprep.subr.bf16.mxu0 0
        %1716 = vmatpush1.bf16.msra.mxu0 0
        %1717 = vmatprep.subr.bf16.mxu0 0
        %1718 = vmatpush1.bf16.msra.mxu0 0
        %1719 = vmatprep.subr.bf16.mxu0 0
        %1720 = vmatpush1.bf16.msra.mxu0 0
        %1721 = vmatprep.mubr.bf16.mxu0 0
        %1722 = vmatmul.mubr.bf16.gmra.mrb[0].mxu0 %v1687
        %v1723 = vpop.f32.mrb[0].mxu0
        %v1724 = vadd.f32 %v1675, %v1723
        %v1725 = vpop.f32.mrb[0].mxu0
        %v1726 = vpop.f32.mrb[0].mxu0
        %v1727 = vadd.f32 %v1679, %v1726
        %v1728 = vpop.f32.mrb[0].mxu0
        %1729 = vdwg.mxu0
        %v1730 = vadd.f32 %v988, %v1724
        %v1731 = vadd.f32 %v989, %v1727
        %1732 = vadd.xlane.f32.xlu0 %v1730
        %v1733 = vpop.xlane.xlu0 %1732
        %1734 = vadd.xlane.f32.xlu0 %v1731
        %v1735 = vpop.xlane.xlu0 %1734
        %v1736 = vmul.f32 %v1733, %v249
        %v1737 = vmul.f32 %v1735, %v249
        %v1738 = vmul.f32 %v1730, %v1730
        %v1739 = vmul.f32 %v1731, %v1731
        %1740 = vadd.xlane.f32.xlu0 %v1738
        %v1741 = vpop.xlane.xlu0 %1740
        %1742 = vadd.xlane.f32.xlu0 %v1739
        %v1743 = vpop.xlane.xlu0 %1742
        %v1744 = vmul.f32 %v1741, %v249
        %v1745 = vmul.f32 %v1743, %v249
        %v1746 = vmul.f32 %v1736, %v1736
        %v1747 = vmul.f32 %v1737, %v1737
        %v1748 = vsub.f32 %v1744, %v1746
        %v1749 = vsub.f32 %v1745, %v1747
        %v1750 = vadd.f32 %v1748, 1e-05
        %v1751 = vadd.f32 %v1749, 1e-05
        %v1752 = vrsqrt.pop %v1750
        %v1753 = vrsqrt.pop %v1751
        %v1754 = vmul.f32 %v239, %v1752
        %v1755 = vmul.f32 %v240, %v1753
        %1757 = vset.pattern.permute.xlu0 8
        %1758 = vperm.xlu0 %1757, %v1754
        %v1759 = vpop.permute.xlu0 %1758
        %1762 = vset.pattern.permute.xlu0 8
        %1763 = vperm.xlu0 %1762, %v1755
        %v1764 = vpop.permute.xlu0 %1763
        %v1766 = vmul.f32 %v1759, %v1730
        %v1767 = vmul.f32 %v1764, %v1731
        %v1768 = vmul.f32 %v1754, %v1736
        %v1769 = vmul.f32 %v1755, %v1737
        %1772 = vrot.lane.b32.xlu0 %v1768, 1
        %v1773 = vpop.permute.xlu0 %1772
        %1774 = vrot.lane.b32.xlu0 %v1769, 1
        %v1775 = vpop.permute.xlu0 %1774
        %v1778 = vsub.f32 %v239, %v1773
        %v1779 = vsub.f32 %v240, %v1775
        %1781 = vset.pattern.permute.xlu0 9
        %1782 = vperm.xlu0 %1781, %v1778
        %v1783 = vpop.permute.xlu0 %1782
        %1786 = vset.pattern.permute.xlu0 9
        %1787 = vperm.xlu0 %1786, %v1779
        %v1788 = vpop.permute.xlu0 %1787
        %v1790 = vadd.f32 %v1766, %v1783
        %v1791 = vadd.f32 %v1767, %v1788
        %1792 = vset.pattern.permute.xlu0 14
        %1793 = vperm.xlu0 %1792, %v241
        %v1794 = vpop.permute.xlu0 %1793
        %1796 = vset.pattern.permute.xlu0 14
        %1797 = vperm.xlu0 %1796, %v242
        %v1798 = vpop.permute.xlu0 %1797
        %v1800 = vmul.f32 %v1794, %v1790
        %v1801 = vmul.f32 %v1798, %v1791
        %v1802 = vand.u32 2147483647, %v1800
        %vm1803 = vcmp.le.f32.partialorder %v1802, 0.7853982
        %vm1804 = vcmp.lt.s32.totalorder %v1800, 0
        %v1805 = vand.u32 %v1800, 2139095040
        %v1806 = vshrl.u32 %v1805, 23
        %v1807 = vsub.s32 %v1806, 127
        %v1808 = vand.u32 2147483647, %v1800
        %v1809 = vand.u32 %v1808, 8388607
        %v1810 = vor.u32 %v1809, 8388608
        %v1811 = vsub.s32 0, %v1810
        %v1812 = vadd.s32 %v1807, 1
        %vm1813 = vcmp.gt.s32.totalorder %v1812, 0
        %v1814 = vsel %vm1813, %v1812, 0
        %v1815 = vshrl.u32 %v1814, 5
        %v1816 = vand.u32 %v1814, 31
        %v1817 = vsub.s32 32, %v1816
        %v1818 = vshrl.u32 683565275, %v1817
        %v1819 = vshll.u32 683565275, %v1816
        %v1820 = vshrl.u32 2475754826, %v1817
        %v1821 = vor.u32 %v1819, %v1820
        %v1822 = vshll.u32 2475754826, %v1816
        %v1823 = vshrl.u32 2131351028, %v1817
        %v1824 = vor.u32 %v1822, %v1823
        %v1825 = vshll.u32 2131351028, %v1816
        %v1826 = vshrl.u32 2102212464, %v1817
        %v1827 = vor.u32 %v1825, %v1826
        %v1828 = vshll.u32 2102212464, %v1816
        %v1829 = vshrl.u32 920167782, %v1817
        %v1830 = vor.u32 %v1828, %v1829
        %v1831 = vshll.u32 920167782, %v1816
        %v1832 = vshrl.u32 1326507024, %v1817
        %v1833 = vor.u32 %v1831, %v1832
        %vm1834 = vcmp.lt.s32.totalorder %v1815, 1
        %vm1835 = vcmp.lt.s32.totalorder %v1815, 2
        %vm1836 = vcmp.lt.s32.totalorder %v1815, 3
        %vm1837 = vcmp.lt.s32.totalorder %v1815, 4
        %v1838 = vsel %vm1834, %v1818, %v1821
        %v1839 = vsel %vm1837, %v1827, 2102212464
        %v1840 = vsel %vm1836, %v1824, %v1839
        %v1841 = vsel %vm1835, %v1838, %v1840
        %v1842 = vsel %vm1834, %v1821, %v1824
        %v1843 = vsel %vm1837, %v1830, 920167782
        %v1844 = vsel %vm1836, %v1827, %v1843
        %v1845 = vsel %vm1835, %v1842, %v1844
        %v1846 = vsel %vm1834, %v1824, %v1827
        %v1847 = vsel %vm1837, %v1833, 1326507024
        %v1848 = vsel %vm1836, %v1830, %v1847
        %v1849 = vsel %vm1835, %v1846, %v1848
        %v1850 = vshll.u32 %v1810, 8
        %v1851 = vmul.u32.u64.compose %v1850, %v1849
        %v1852 = vextract.low.u32 %v1851
        %v1853 = vextract.high.u32 %v1851
        %v1854 = vmul.u32.u64.compose %v1850, %v1845
        %v1855 = vextract.low.u32 %v1854
        %v1856 = vextract.high.u32 %v1854
        %v1857 = vmul.u32 %v1850, %v1841
        %v1858 = vadd.s32 %v1853, %v1855
        %vm1859 = vc.u32 %v1853, %v1855
        %v1860 = vadd.s32 %v1856, 1
        %v1861 = vsel %vm1859, %v1860, %v1856
        %v1862 = vadd.s32 %v1857, %v1861
        %v1863 = vadd.s32 %v1862, 536870912
        %v1864 = vshrl.u32 %v1863, 30
        %v1865 = vshll.u32 %v1864, 30
        %v1866 = vsub.s32 %v1862, %v1865
        %vm1867 = vcmp.lt.s32.totalorder %v1866, 0
        %v1868 = vsub.s32 0, %v1866
        %v1869 = vsel %vm1867, %v1868, %v1866
        %v1870 = vclz %v1869
        %v1871 = vsub.s32 %v1870, 2
        %vm1872 = vcmp.gt.s32.totalorder 0, %v1871
        %v1873 = vsel %vm1872, 0, %v1871
        %v1874 = vsub.s32 32, %v1873
        %v1875 = vshll.u32 %v1866, %v1873
        %v1876 = vshrl.u32 %v1858, %v1874
        %v1877 = vor.u32 %v1875, %v1876
        %v1878 = vsub.s32 4294967266, %v1873
        %v1879 = vadd.s32 %v1878, 127
        %v1880 = vshll.u32 %v1879, 23
        %v1881 = vor.u32 4788187, %v1880
        %v1882 = vand.u32 2147483647, %v1881
        %v1884 = vcvt.s32.f32 %v1877
        %v1885 = vmul.f32 %v1884, %v1882
        %v1886 = vxor.u32 %v1885, 2147483648
        %v1887 = vsel %vm1804, %v1886, %v1885
        %v1888 = vsub.s32 4, %v1864
        %v1889 = vsel %vm1804, %v1888, %v1864
        %v1890 = vsel %vm1803, %v1800, %v1887
        %v1891 = vsel %vm1803, 0, %v1889
        %v1892 = vcosq.f32.pop %v1890
        %v1893 = vsinq.f32.pop %v1890
        %vm1894 = vweird.f32 %v1800
        %v1895 = vadd.s32 %v1891, 3
        %v1896 = vand.u32 %v1895, 3
        %vm1897 = vcmp.lt.s32.totalorder %v1896, 2
        %vm1898 = vcmp.eq.s32.totalorder %v1896, 0
        %v1899 = vxor.u32 %v1893, 2147483648
        %v1900 = vsel %vm1898, %v1892, %v1899
        %vm1901 = vcmp.eq.s32.totalorder %v1896, 2
        %v1902 = vxor.u32 %v1892, 2147483648
        %v1903 = vsel %vm1901, %v1902, %v1893
        %v1904 = vsel %vm1897, %v1900, %v1903
        %v1905 = vsel %vm1894, nan, %v1904
        %v1906 = vand.u32 2147483647, %v1801
        %vm1907 = vcmp.le.f32.partialorder %v1906, 0.7853982
        %vm1908 = vcmp.lt.s32.totalorder %v1801, 0
        %v1909 = vand.u32 %v1801, 2139095040
        %v1910 = vshrl.u32 %v1909, 23
        %v1911 = vsub.s32 %v1910, 127
        %v1912 = vand.u32 2147483647, %v1801
        %v1913 = vand.u32 %v1912, 8388607
        %v1914 = vor.u32 %v1913, 8388608
        %v1915 = vsub.s32 0, %v1914
        %v1916 = vadd.s32 %v1911, 1
        %vm1917 = vcmp.gt.s32.totalorder %v1916, 0
        %v1918 = vsel %vm1917, %v1916, 0
        %v1919 = vshrl.u32 %v1918, 5
        %v1920 = vand.u32 %v1918, 31
        %v1921 = vsub.s32 32, %v1920
        %v1922 = vshrl.u32 683565275, %v1921
        %v1923 = vshll.u32 683565275, %v1920
        %v1924 = vshrl.u32 2475754826, %v1921
        %v1925 = vor.u32 %v1923, %v1924
        %v1926 = vshll.u32 2475754826, %v1920
        %v1927 = vshrl.u32 2131351028, %v1921
        %v1928 = vor.u32 %v1926, %v1927
        %v1929 = vshll.u32 2131351028, %v1920
        %v1930 = vshrl.u32 2102212464, %v1921
        %v1931 = vor.u32 %v1929, %v1930
        %v1932 = vshll.u32 2102212464, %v1920
        %v1933 = vshrl.u32 920167782, %v1921
        %v1934 = vor.u32 %v1932, %v1933
        %v1935 = vshll.u32 920167782, %v1920
        %v1936 = vshrl.u32 1326507024, %v1921
        %v1937 = vor.u32 %v1935, %v1936
        %vm1938 = vcmp.lt.s32.totalorder %v1919, 1
        %vm1939 = vcmp.lt.s32.totalorder %v1919, 2
        %vm1940 = vcmp.lt.s32.totalorder %v1919, 3
        %vm1941 = vcmp.lt.s32.totalorder %v1919, 4
        %v1942 = vsel %vm1938, %v1922, %v1925
        %v1943 = vsel %vm1941, %v1931, 2102212464
        %v1944 = vsel %vm1940, %v1928, %v1943
        %v1945 = vsel %vm1939, %v1942, %v1944
        %v1946 = vsel %vm1938, %v1925, %v1928
        %v1947 = vsel %vm1941, %v1934, 920167782
        %v1948 = vsel %vm1940, %v1931, %v1947
        %v1949 = vsel %vm1939, %v1946, %v1948
        %v1950 = vsel %vm1938, %v1928, %v1931
        %v1951 = vsel %vm1941, %v1937, 1326507024
        %v1952 = vsel %vm1940, %v1934, %v1951
        %v1953 = vsel %vm1939, %v1950, %v1952
        %v1954 = vshll.u32 %v1914, 8
        %v1955 = vmul.u32.u64.compose %v1954, %v1953
        %v1956 = vextract.low.u32 %v1955
        %v1957 = vextract.high.u32 %v1955
        %v1958 = vmul.u32.u64.compose %v1954, %v1949
        %v1959 = vextract.low.u32 %v1958
        %v1960 = vextract.high.u32 %v1958
        %v1961 = vmul.u32 %v1954, %v1945
        %v1962 = vadd.s32 %v1957, %v1959
        %vm1963 = vc.u32 %v1957, %v1959
        %v1964 = vadd.s32 %v1960, 1
        %v1965 = vsel %vm1963, %v1964, %v1960
        %v1966 = vadd.s32 %v1961, %v1965
        %v1967 = vadd.s32 %v1966, 536870912
        %v1968 = vshrl.u32 %v1967, 30
        %v1969 = vshll.u32 %v1968, 30
        %v1970 = vsub.s32 %v1966, %v1969
        %vm1971 = vcmp.lt.s32.totalorder %v1970, 0
        %v1972 = vsub.s32 0, %v1970
        %v1973 = vsel %vm1971, %v1972, %v1970
        %v1974 = vclz %v1973
        %v1975 = vsub.s32 %v1974, 2
        %vm1976 = vcmp.gt.s32.totalorder 0, %v1975
        %v1977 = vsel %vm1976, 0, %v1975
        %v1978 = vsub.s32 32, %v1977
        %v1979 = vshll.u32 %v1970, %v1977
        %v1980 = vshrl.u32 %v1962, %v1978
        %v1981 = vor.u32 %v1979, %v1980
        %v1982 = vsub.s32 4294967266, %v1977
        %v1983 = vadd.s32 %v1982, 127
        %v1984 = vshll.u32 %v1983, 23
        %v1985 = vor.u32 4788187, %v1984
        %v1986 = vand.u32 2147483647, %v1985
        %v1988 = vcvt.s32.f32 %v1981
        %v1989 = vmul.f32 %v1988, %v1986
        %v1990 = vxor.u32 %v1989, 2147483648
        %v1991 = vsel %vm1908, %v1990, %v1989
        %v1992 = vsub.s32 4, %v1968
        %v1993 = vsel %vm1908, %v1992, %v1968
        %v1994 = vsel %vm1907, %v1801, %v1991
        %v1995 = vsel %vm1907, 0, %v1993
        %v1996 = vcosq.f32.pop %v1994
        %v1997 = vsinq.f32.pop %v1994
        %vm1998 = vweird.f32 %v1801
        %v1999 = vadd.s32 %v1995, 3
        %v2000 = vand.u32 %v1999, 3
        %vm2001 = vcmp.lt.s32.totalorder %v2000, 2
        %vm2002 = vcmp.eq.s32.totalorder %v2000, 0
        %v2003 = vxor.u32 %v1997, 2147483648
        %v2004 = vsel %vm2002, %v1996, %v2003
        %vm2005 = vcmp.eq.s32.totalorder %v2000, 2
        %v2006 = vxor.u32 %v1996, 2147483648
        %v2007 = vsel %vm2005, %v2006, %v1997
        %v2008 = vsel %vm2001, %v2004, %v2007
        %v2009 = vsel %vm1998, nan, %v2008
        %v2010 = vmul.f32 %v1905, %v1905
        %v2011 = vmul.f32 %v2009, %v2009
        %2012 = vset.pattern.permute.xlu0 15
        %2013 = vperm.xlu0 %2012, %v241
        %v2014 = vpop.permute.xlu0 %2013
        %2016 = vset.pattern.permute.xlu0 15
        %2017 = vperm.xlu0 %2016, %v242
        %v2018 = vpop.permute.xlu0 %2017
        %v2020 = vmul.f32 %v2014, %v2010
        %v2021 = vmul.f32 %v2018, %v2011
        %v2022 = vadd.f32 %v1790, %v2020
        %v2023 = vadd.f32 %v1791, %v2021
        %s2024 = scalar_lea.vmem %s3, 32
        %v2025 = vld [vmem:[%s2024] sm:$0xf]
        %v2026 = vld [vmem:[%s2024 + $0x4] sm:$0xf]
        %2027 = vrot.lane.b32.xlu0 %v2022, 5
        %v2028 = vpop.permute.xlu0 %2027
        %2029 = vrot.lane.b32.xlu0 %v2023, 5
        %v2030 = vpop.permute.xlu0 %2029
        %vm2031 = vcmp.ge.s32.totalorder %v244, 5
        %vm2032 = vcmp.lt.s32.totalorder %v244, 133
        %vm2033 = vmand %vm2031, %vm2032
        %v2034 = vsel %vm2033, %v2028, 0.0
        %v2035 = vsel %vm2033, %v2030, 0.0
        %2036 = vrot.lane.b32.xlu0 %v2022, 123
        %v2037 = vpop.permute.xlu0 %2036
        %2038 = vrot.lane.b32.xlu0 %v2023, 123
        %v2039 = vpop.permute.xlu0 %2038
        %vm2040 = vcmp.ge.s32.totalorder %v244, 4294967291
        %vm2041 = vcmp.lt.s32.totalorder %v244, 123
        %vm2042 = vmand %vm2040, %vm2041
        %v2043 = vsel %vm2042, %v2037, 0.0
        %v2044 = vsel %vm2042, %v2039, 0.0
        %v2045 = vpack.c.bf16 %v2035, %v2034
        %v2046 = vpack.c.bf16 %v2023, %v2022
        %v2047 = vpack.c.bf16 %v2044, %v2043
        %2048 = vset.pattern.permute.xlu0 12
        %2049 = vperm.xlu0 %2048, %v241
        %v2050 = vpop.permute.xlu0 %2049
        %2052 = vset.pattern.permute.xlu0 12
        %2053 = vperm.xlu0 %2052, %v242
        %v2054 = vpop.permute.xlu0 %2053
        %v2058 = vunpack.c.l.b16 %v2025
        %v2059 = vunpack.c.l.b16 %v2026
        %v2060 = vpack.c.b16 %v2059, %v2058
        %v2062 = vsel %vm576, %v2060, 0
        %2064 = vmatprep.subr.bf16.mxu0 0
        %2065 = vmatpush1.bf16.msra.mxu0 %v2045
        %2066 = vmatprep.subr.bf16.mxu0 0
        %2067 = vmatpush1.bf16.msra.mxu0 %v2046
        %2068 = vmatprep.subr.bf16.mxu0 0
        %2069 = vmatpush1.bf16.msra.mxu0 %v2047
        %2070 = vmatprep.subr.bf16.mxu0 0
        %2071 = vmatpush1.bf16.msra.mxu0 0
        %2072 = vmatprep.subr.bf16.mxu0 0
        %2073 = vmatpush1.bf16.msra.mxu0 0
        %2074 = vmatprep.subr.bf16.mxu0 0
        %2075 = vmatpush1.bf16.msra.mxu0 0
        %2076 = vmatprep.subr.bf16.mxu0 0
        %2077 = vmatpush1.bf16.msra.mxu0 0
        %2078 = vmatprep.subr.bf16.mxu0 0
        %2079 = vmatpush1.bf16.msra.mxu0 0
        %2080 = vmatprep.subr.bf16.mxu0 0
        %2081 = vmatpush1.bf16.msra.mxu0 0
        %2082 = vmatprep.subr.bf16.mxu0 0
        %2083 = vmatpush1.bf16.msra.mxu0 0
        %2084 = vmatprep.subr.bf16.mxu0 0
        %2085 = vmatpush1.bf16.msra.mxu0 0
        %2086 = vmatprep.subr.bf16.mxu0 0
        %2087 = vmatpush1.bf16.msra.mxu0 0
        %2088 = vmatprep.subr.bf16.mxu0 0
        %2089 = vmatpush1.bf16.msra.mxu0 0
        %2090 = vmatprep.subr.bf16.mxu0 0
        %2091 = vmatpush1.bf16.msra.mxu0 0
        %2092 = vmatprep.subr.bf16.mxu0 0
        %2093 = vmatpush1.bf16.msra.mxu0 0
        %2094 = vmatprep.subr.bf16.mxu0 0
        %2095 = vmatpush1.bf16.msra.mxu0 0
        %2096 = vmatprep.mubr.bf16.mxu0 0
        %2097 = vmatmul.mubr.bf16.gmra.mrb[0].mxu0 %v2062
        %v2098 = vpop.f32.mrb[0].mxu0
        %v2099 = vadd.f32 %v2050, %v2098
        %v2100 = vpop.f32.mrb[0].mxu0
        %v2101 = vpop.f32.mrb[0].mxu0
        %v2102 = vadd.f32 %v2054, %v2101
        %v2103 = vpop.f32.mrb[0].mxu0
        %2104 = vdwg.mxu0
        %2105 = vadd.xlane.f32.xlu0 %v2099
        %v2106 = vpop.xlane.xlu0 %2105
        %2107 = vadd.xlane.f32.xlu0 %v2102
        %v2108 = vpop.xlane.xlu0 %2107
        %v2109 = vmul.f32 %v2106, %v249
        %v2110 = vmul.f32 %v2108, %v249
        %v2111 = vmul.f32 %v2099, %v2099
        %v2112 = vmul.f32 %v2102, %v2102
        %2113 = vadd.xlane.f32.xlu0 %v2111
        %v2114 = vpop.xlane.xlu0 %2113
        %2115 = vadd.xlane.f32.xlu0 %v2112
        %v2116 = vpop.xlane.xlu0 %2115
        %v2117 = vmul.f32 %v2114, %v249
        %v2118 = vmul.f32 %v2116, %v249
        %v2119 = vmul.f32 %v2109, %v2109
        %v2120 = vmul.f32 %v2110, %v2110
        %v2121 = vsub.f32 %v2117, %v2119
        %v2122 = vsub.f32 %v2118, %v2120
        %v2123 = vadd.f32 %v2121, 1e-05
        %v2124 = vadd.f32 %v2122, 1e-05
        %v2125 = vrsqrt.pop %v2123
        %v2126 = vrsqrt.pop %v2124
        %v2127 = vmul.f32 %v239, %v2125
        %v2128 = vmul.f32 %v240, %v2126
        %2130 = vset.pattern.permute.xlu0 10
        %2131 = vperm.xlu0 %2130, %v2127
        %v2132 = vpop.permute.xlu0 %2131
        %2135 = vset.pattern.permute.xlu0 10
        %2136 = vperm.xlu0 %2135, %v2128
        %v2137 = vpop.permute.xlu0 %2136
        %v2139 = vmul.f32 %v2132, %v2099
        %v2140 = vmul.f32 %v2137, %v2102
        %v2141 = vmul.f32 %v2127, %v2109
        %v2142 = vmul.f32 %v2128, %v2110
        %2145 = vrot.lane.b32.xlu0 %v2141, 1
        %v2146 = vpop.permute.xlu0 %2145
        %2147 = vrot.lane.b32.xlu0 %v2142, 1
        %v2148 = vpop.permute.xlu0 %2147
        %v2151 = vsub.f32 %v239, %v2146
        %v2152 = vsub.f32 %v240, %v2148
        %2154 = vset.pattern.permute.xlu0 11
        %2155 = vperm.xlu0 %2154, %v2151
        %v2156 = vpop.permute.xlu0 %2155
        %2159 = vset.pattern.permute.xlu0 11
        %2160 = vperm.xlu0 %2159, %v2152
        %v2161 = vpop.permute.xlu0 %2160
        %v2163 = vadd.f32 %v2139, %v2156
        %v2164 = vadd.f32 %v2140, %v2161
        %2165 = vset.pattern.permute.xlu0 16
        %2166 = vperm.xlu0 %2165, %v241
        %v2167 = vpop.permute.xlu0 %2166
        %2169 = vset.pattern.permute.xlu0 16
        %2170 = vperm.xlu0 %2169, %v242
        %v2171 = vpop.permute.xlu0 %2170
        %v2173 = vmul.f32 %v2167, %v2163
        %v2174 = vmul.f32 %v2171, %v2164
        %v2175 = vand.u32 2147483647, %v2173
        %vm2176 = vcmp.le.f32.partialorder %v2175, 0.7853982
        %vm2177 = vcmp.lt.s32.totalorder %v2173, 0
        %v2178 = vand.u32 %v2173, 2139095040
        %v2179 = vshrl.u32 %v2178, 23
        %v2180 = vsub.s32 %v2179, 127
        %v2181 = vand.u32 2147483647, %v2173
        %v2182 = vand.u32 %v2181, 8388607
        %v2183 = vor.u32 %v2182, 8388608
        %v2184 = vsub.s32 0, %v2183
        %v2185 = vadd.s32 %v2180, 1
        %vm2186 = vcmp.gt.s32.totalorder %v2185, 0
        %v2187 = vsel %vm2186, %v2185, 0
        %v2188 = vshrl.u32 %v2187, 5
        %v2189 = vand.u32 %v2187, 31
        %v2190 = vsub.s32 32, %v2189
        %v2191 = vshrl.u32 683565275, %v2190
        %v2192 = vshll.u32 683565275, %v2189
        %v2193 = vshrl.u32 2475754826, %v2190
        %v2194 = vor.u32 %v2192, %v2193
        %v2195 = vshll.u32 2475754826, %v2189
        %v2196 = vshrl.u32 2131351028, %v2190
        %v2197 = vor.u32 %v2195, %v2196
        %v2198 = vshll.u32 2131351028, %v2189
        %v2199 = vshrl.u32 2102212464, %v2190
        %v2200 = vor.u32 %v2198, %v2199
        %v2201 = vshll.u32 2102212464, %v2189
        %v2202 = vshrl.u32 920167782, %v2190
        %v2203 = vor.u32 %v2201, %v2202
        %v2204 = vshll.u32 920167782, %v2189
        %v2205 = vshrl.u32 1326507024, %v2190
        %v2206 = vor.u32 %v2204, %v2205
        %vm2207 = vcmp.lt.s32.totalorder %v2188, 1
        %vm2208 = vcmp.lt.s32.totalorder %v2188, 2
        %vm2209 = vcmp.lt.s32.totalorder %v2188, 3
        %vm2210 = vcmp.lt.s32.totalorder %v2188, 4
        %v2211 = vsel %vm2207, %v2191, %v2194
        %v2212 = vsel %vm2210, %v2200, 2102212464
        %v2213 = vsel %vm2209, %v2197, %v2212
        %v2214 = vsel %vm2208, %v2211, %v2213
        %v2215 = vsel %vm2207, %v2194, %v2197
        %v2216 = vsel %vm2210, %v2203, 920167782
        %v2217 = vsel %vm2209, %v2200, %v2216
        %v2218 = vsel %vm2208, %v2215, %v2217
        %v2219 = vsel %vm2207, %v2197, %v2200
        %v2220 = vsel %vm2210, %v2206, 1326507024
        %v2221 = vsel %vm2209, %v2203, %v2220
        %v2222 = vsel %vm2208, %v2219, %v2221
        %v2223 = vshll.u32 %v2183, 8
        %v2224 = vmul.u32.u64.compose %v2223, %v2222
        %v2225 = vextract.low.u32 %v2224
        %v2226 = vextract.high.u32 %v2224
        %v2227 = vmul.u32.u64.compose %v2223, %v2218
        %v2228 = vextract.low.u32 %v2227
        %v2229 = vextract.high.u32 %v2227
        %v2230 = vmul.u32 %v2223, %v2214
        %v2231 = vadd.s32 %v2226, %v2228
        %vm2232 = vc.u32 %v2226, %v2228
        %v2233 = vadd.s32 %v2229, 1
        %v2234 = vsel %vm2232, %v2233, %v2229
        %v2235 = vadd.s32 %v2230, %v2234
        %v2236 = vadd.s32 %v2235, 536870912
        %v2237 = vshrl.u32 %v2236, 30
        %v2238 = vshll.u32 %v2237, 30
        %v2239 = vsub.s32 %v2235, %v2238
        %vm2240 = vcmp.lt.s32.totalorder %v2239, 0
        %v2241 = vsub.s32 0, %v2239
        %v2242 = vsel %vm2240, %v2241, %v2239
        %v2243 = vclz %v2242
        %v2244 = vsub.s32 %v2243, 2
        %vm2245 = vcmp.gt.s32.totalorder 0, %v2244
        %v2246 = vsel %vm2245, 0, %v2244
        %v2247 = vsub.s32 32, %v2246
        %v2248 = vshll.u32 %v2239, %v2246
        %v2249 = vshrl.u32 %v2231, %v2247
        %v2250 = vor.u32 %v2248, %v2249
        %v2251 = vsub.s32 4294967266, %v2246
        %v2252 = vadd.s32 %v2251, 127
        %v2253 = vshll.u32 %v2252, 23
        %v2254 = vor.u32 4788187, %v2253
        %v2255 = vand.u32 2147483647, %v2254
        %v2257 = vcvt.s32.f32 %v2250
        %v2258 = vmul.f32 %v2257, %v2255
        %v2259 = vxor.u32 %v2258, 2147483648
        %v2260 = vsel %vm2177, %v2259, %v2258
        %v2261 = vsub.s32 4, %v2237
        %v2262 = vsel %vm2177, %v2261, %v2237
        %v2263 = vsel %vm2176, %v2173, %v2260
        %v2264 = vsel %vm2176, 0, %v2262
        %v2265 = vcosq.f32.pop %v2263
        %v2266 = vsinq.f32.pop %v2263
        %vm2267 = vweird.f32 %v2173
        %v2268 = vadd.s32 %v2264, 3
        %v2269 = vand.u32 %v2268, 3
        %vm2270 = vcmp.lt.s32.totalorder %v2269, 2
        %vm2271 = vcmp.eq.s32.totalorder %v2269, 0
        %v2272 = vxor.u32 %v2266, 2147483648
        %v2273 = vsel %vm2271, %v2265, %v2272
        %vm2274 = vcmp.eq.s32.totalorder %v2269, 2
        %v2275 = vxor.u32 %v2265, 2147483648
        %v2276 = vsel %vm2274, %v2275, %v2266
        %v2277 = vsel %vm2270, %v2273, %v2276
        %v2278 = vsel %vm2267, nan, %v2277
        %v2279 = vand.u32 2147483647, %v2174
        %vm2280 = vcmp.le.f32.partialorder %v2279, 0.7853982
        %vm2281 = vcmp.lt.s32.totalorder %v2174, 0
        %v2282 = vand.u32 %v2174, 2139095040
        %v2283 = vshrl.u32 %v2282, 23
        %v2284 = vsub.s32 %v2283, 127
        %v2285 = vand.u32 2147483647, %v2174
        %v2286 = vand.u32 %v2285, 8388607
        %v2287 = vor.u32 %v2286, 8388608
        %v2288 = vsub.s32 0, %v2287
        %v2289 = vadd.s32 %v2284, 1
        %vm2290 = vcmp.gt.s32.totalorder %v2289, 0
        %v2291 = vsel %vm2290, %v2289, 0
        %v2292 = vshrl.u32 %v2291, 5
        %v2293 = vand.u32 %v2291, 31
        %v2294 = vsub.s32 32, %v2293
        %v2295 = vshrl.u32 683565275, %v2294
        %v2296 = vshll.u32 683565275, %v2293
        %v2297 = vshrl.u32 2475754826, %v2294
        %v2298 = vor.u32 %v2296, %v2297
        %v2299 = vshll.u32 2475754826, %v2293
        %v2300 = vshrl.u32 2131351028, %v2294
        %v2301 = vor.u32 %v2299, %v2300
        %v2302 = vshll.u32 2131351028, %v2293
        %v2303 = vshrl.u32 2102212464, %v2294
        %v2304 = vor.u32 %v2302, %v2303
        %v2305 = vshll.u32 2102212464, %v2293
        %v2306 = vshrl.u32 920167782, %v2294
        %v2307 = vor.u32 %v2305, %v2306
        %v2308 = vshll.u32 920167782, %v2293
        %v2309 = vshrl.u32 1326507024, %v2294
        %v2310 = vor.u32 %v2308, %v2309
        %vm2311 = vcmp.lt.s32.totalorder %v2292, 1
        %vm2312 = vcmp.lt.s32.totalorder %v2292, 2
        %vm2313 = vcmp.lt.s32.totalorder %v2292, 3
        %vm2314 = vcmp.lt.s32.totalorder %v2292, 4
        %v2315 = vsel %vm2311, %v2295, %v2298
        %v2316 = vsel %vm2314, %v2304, 2102212464
        %v2317 = vsel %vm2313, %v2301, %v2316
        %v2318 = vsel %vm2312, %v2315, %v2317
        %v2319 = vsel %vm2311, %v2298, %v2301
        %v2320 = vsel %vm2314, %v2307, 920167782
        %v2321 = vsel %vm2313, %v2304, %v2320
        %v2322 = vsel %vm2312, %v2319, %v2321
        %v2323 = vsel %vm2311, %v2301, %v2304
        %v2324 = vsel %vm2314, %v2310, 1326507024
        %v2325 = vsel %vm2313, %v2307, %v2324
        %v2326 = vsel %vm2312, %v2323, %v2325
        %v2327 = vshll.u32 %v2287, 8
        %v2328 = vmul.u32.u64.compose %v2327, %v2326
        %v2329 = vextract.low.u32 %v2328
        %v2330 = vextract.high.u32 %v2328
        %v2331 = vmul.u32.u64.compose %v2327, %v2322
        %v2332 = vextract.low.u32 %v2331
        %v2333 = vextract.high.u32 %v2331
        %v2334 = vmul.u32 %v2327, %v2318
        %v2335 = vadd.s32 %v2330, %v2332
        %vm2336 = vc.u32 %v2330, %v2332
        %v2337 = vadd.s32 %v2333, 1
        %v2338 = vsel %vm2336, %v2337, %v2333
        %v2339 = vadd.s32 %v2334, %v2338
        %v2340 = vadd.s32 %v2339, 536870912
        %v2341 = vshrl.u32 %v2340, 30
        %v2342 = vshll.u32 %v2341, 30
        %v2343 = vsub.s32 %v2339, %v2342
        %vm2344 = vcmp.lt.s32.totalorder %v2343, 0
        %v2345 = vsub.s32 0, %v2343
        %v2346 = vsel %vm2344, %v2345, %v2343
        %v2347 = vclz %v2346
        %v2348 = vsub.s32 %v2347, 2
        %vm2349 = vcmp.gt.s32.totalorder 0, %v2348
        %v2350 = vsel %vm2349, 0, %v2348
        %v2351 = vsub.s32 32, %v2350
        %v2352 = vshll.u32 %v2343, %v2350
        %v2353 = vshrl.u32 %v2335, %v2351
        %v2354 = vor.u32 %v2352, %v2353
        %v2355 = vsub.s32 4294967266, %v2350
        %v2356 = vadd.s32 %v2355, 127
        %v2357 = vshll.u32 %v2356, 23
        %v2358 = vor.u32 4788187, %v2357
        %v2359 = vand.u32 2147483647, %v2358
        %v2361 = vcvt.s32.f32 %v2354
        %v2362 = vmul.f32 %v2361, %v2359
        %v2363 = vxor.u32 %v2362, 2147483648
        %v2364 = vsel %vm2281, %v2363, %v2362
        %v2365 = vsub.s32 4, %v2341
        %v2366 = vsel %vm2281, %v2365, %v2341
        %v2367 = vsel %vm2280, %v2174, %v2364
        %v2368 = vsel %vm2280, 0, %v2366
        %v2369 = vcosq.f32.pop %v2367
        %v2370 = vsinq.f32.pop %v2367
        %vm2371 = vweird.f32 %v2174
        %v2372 = vadd.s32 %v2368, 3
        %v2373 = vand.u32 %v2372, 3
        %vm2374 = vcmp.lt.s32.totalorder %v2373, 2
        %vm2375 = vcmp.eq.s32.totalorder %v2373, 0
        %v2376 = vxor.u32 %v2370, 2147483648
        %v2377 = vsel %vm2375, %v2369, %v2376
        %vm2378 = vcmp.eq.s32.totalorder %v2373, 2
        %v2379 = vxor.u32 %v2369, 2147483648
        %v2380 = vsel %vm2378, %v2379, %v2370
        %v2381 = vsel %vm2374, %v2377, %v2380
        %v2382 = vsel %vm2371, nan, %v2381
        %v2383 = vmul.f32 %v2278, %v2278
        %v2384 = vmul.f32 %v2382, %v2382
        %2385 = vset.pattern.permute.xlu0 17
        %2386 = vperm.xlu0 %2385, %v241
        %v2387 = vpop.permute.xlu0 %2386
        %2389 = vset.pattern.permute.xlu0 17
        %2390 = vperm.xlu0 %2389, %v242
        %v2391 = vpop.permute.xlu0 %2390
        %v2393 = vmul.f32 %v2387, %v2383
        %v2394 = vmul.f32 %v2391, %v2384
        %v2395 = vadd.f32 %v2163, %v2393
        %v2396 = vadd.f32 %v2164, %v2394
        %s2397 = scalar_lea.vmem %s3, 40
        %v2398 = vld [vmem:[%s2397] sm:$0xf]
        %v2399 = vld [vmem:[%s2397 + $0x4] sm:$0xf]
        %2400 = vrot.lane.b32.xlu0 %v2395, 1
        %v2401 = vpop.permute.xlu0 %2400
        %2402 = vrot.lane.b32.xlu0 %v2396, 1
        %v2403 = vpop.permute.xlu0 %2402
        %v2404 = vsel %vm548, %v2401, 0.0
        %v2405 = vsel %vm548, %v2403, 0.0
        %2406 = vrot.lane.b32.xlu0 %v2395, 127
        %v2407 = vpop.permute.xlu0 %2406
        %2408 = vrot.lane.b32.xlu0 %v2396, 127
        %v2409 = vpop.permute.xlu0 %2408
        %v2410 = vsel %vm557, %v2407, 0.0
        %v2411 = vsel %vm557, %v2409, 0.0
        %v2412 = vpack.c.bf16 %v2405, %v2404
        %v2413 = vpack.c.bf16 %v2396, %v2395
        %v2414 = vpack.c.bf16 %v2411, %v2410
        %2415 = vset.pattern.permute.xlu0 13
        %2416 = vperm.xlu0 %2415, %v241
        %v2417 = vpop.permute.xlu0 %2416
        %2419 = vset.pattern.permute.xlu0 13
        %2420 = vperm.xlu0 %2419, %v242
        %v2421 = vpop.permute.xlu0 %2420
        %v2425 = vunpack.c.l.b16 %v2398
        %v2426 = vunpack.c.l.b16 %v2399
        %v2427 = vpack.c.b16 %v2426, %v2425
        %v2429 = vsel %vm576, %v2427, 0
        %2431 = vmatprep.subr.bf16.mxu0 0
        %2432 = vmatpush1.bf16.msra.mxu0 %v2412
        %2433 = vmatprep.subr.bf16.mxu0 0
        %2434 = vmatpush1.bf16.msra.mxu0 %v2413
        %2435 = vmatprep.subr.bf16.mxu0 0
        %2436 = vmatpush1.bf16.msra.mxu0 %v2414
        %2437 = vmatprep.subr.bf16.mxu0 0
        %2438 = vmatpush1.bf16.msra.mxu0 0
        %2439 = vmatprep.subr.bf16.mxu0 0
        %2440 = vmatpush1.bf16.msra.mxu0 0
        %2441 = vmatprep.subr.bf16.mxu0 0
        %2442 = vmatpush1.bf16.msra.mxu0 0
        %2443 = vmatprep.subr.bf16.mxu0 0
        %2444 = vmatpush1.bf16.msra.mxu0 0
        %2445 = vmatprep.subr.bf16.mxu0 0
        %2446 = vmatpush1.bf16.msra.mxu0 0
        %2447 = vmatprep.subr.bf16.mxu0 0
        %2448 = vmatpush1.bf16.msra.mxu0 0
        %2449 = vmatprep.subr.bf16.mxu0 0
        %2450 = vmatpush1.bf16.msra.mxu0 0
        %2451 = vmatprep.subr.bf16.mxu0 0
        %2452 = vmatpush1.bf16.msra.mxu0 0
        %2453 = vmatprep.subr.bf16.mxu0 0
        %2454 = vmatpush1.bf16.msra.mxu0 0
        %2455 = vmatprep.subr.bf16.mxu0 0
        %2456 = vmatpush1.bf16.msra.mxu0 0
        %2457 = vmatprep.subr.bf16.mxu0 0
        %2458 = vmatpush1.bf16.msra.mxu0 0
        %2459 = vmatprep.subr.bf16.mxu0 0
        %2460 = vmatpush1.bf16.msra.mxu0 0
        %2461 = vmatprep.subr.bf16.mxu0 0
        %2462 = vmatpush1.bf16.msra.mxu0 0
        %2463 = vmatprep.mubr.bf16.mxu0 0
        %2464 = vmatmul.mubr.bf16.gmra.mrb[0].mxu0 %v2429
        %v2465 = vpop.f32.mrb[0].mxu0
        %v2466 = vadd.f32 %v2417, %v2465
        %v2467 = vpop.f32.mrb[0].mxu0
        %v2468 = vpop.f32.mrb[0].mxu0
        %v2469 = vadd.f32 %v2421, %v2468
        %v2470 = vpop.f32.mrb[0].mxu0
        %2471 = vdwg.mxu0
        %v2472 = vadd.f32 %v1730, %v2466
        %v2473 = vadd.f32 %v1731, %v2469
        %2474 = vst [vmem:[%s230] sm:$0xff] %v2472
        %2475 = vst [vmem:[%s230 + $0x8] sm:$0xff] %v2473
        %s2476 = sand.u32 %s123, 1
        %s2477 = scalar_lea.sflag [#allocation4], %s2476
        %s2478 = sand.u32 %s123, 1
        %s2479 = smul.addr %s2478, 16
        %s2480 = scalar_lea.vmem [#allocation5], %s2479
        // Predicated region
        $region41: #{tpu_custom_call.1} parent=35 // pred_check
          %p2481 = pneg %p133
        $region42: #{tpu_custom_call.1} parent=35 // pred_check_branch
          %2483 = sbr.rel (%p2481) target = $region44
        $region43: #{tpu_custom_call.1} parent=35 // pred_region
          %s2485 = ssub.s32 256, 256
          %2486 = vsyncadd %s2477, %s2485
          %s2487 = smul.addr %s21, 2
          %s2488 = smul.addr %s2487, 128
          %s2489 = scalar_lea.hbm %s4, %s2488
          %s2490 = sshll.u32 %s2480, 4
          %s2491 = int_to_ptr.vmem [resolvable:$true] %s2490
          %2496 = dma.vmem_to_hbm [thread:$0]  %s2491, 256, %s2489, %s2477, 128, 128, 8
        $region44: #{tpu_custom_call.1} parent=35 // pred_fallthru
          _
      $region36: #{tpu_custom_call.1} parent=5 // pred_fallthru
        _
      %p2497 = scmp.le.s32.totalorder 2, %s16
      // Predicated region
      $region45: #{tpu_custom_call.1} parent=5 // pred_check
        %p2498 = pneg %p2497
      $region46: #{tpu_custom_call.1} parent=5 // pred_check_branch
        %2500 = sbr.rel (%p2498) target = $region48
      $region47: #{tpu_custom_call.1} parent=5 // pred_region
        %s2501 = ssub.s32 %s16, 2
        // Predicated region
        $region49: #{tpu_custom_call.1} parent=47 // pred_check
          %p2502 = pneg %p139
        $region50: #{tpu_custom_call.1} parent=47 // pred_check_branch
          %2504 = sbr.rel (%p2502) target = $region52
        $region51: #{tpu_custom_call.1} parent=47 // pred_region
          %s2505 = sand.u32 %s124, 1
          %s2506 = scalar_lea.sflag [#allocation4], %s2505
          %s2507 = sand.u32 %s124, 1
          %s2508 = smul.addr %s2507, 16
          %s2509 = scalar_lea.vmem [#allocation5], %s2508
          %2510 = dma.done %s2506, 256
        $region52: #{tpu_custom_call.1} parent=47 // pred_fallthru
          _
      $region48: #{tpu_custom_call.1} parent=5 // pred_fallthru
        _
    $region6: #{tpu_custom_call.1} parent=1 // loop_footer
      %s20 = sadd.s32 1, %s16
    $region7: #{tpu_custom_call.1} parent=1 // loop_footer_branch
      %15 = sbr.rel target = $region3
    $region8: #{tpu_custom_call.1} parent=1 // loop_exit
      _
    %2511 = vsyncpa [#allocation3], 1
    %s2512 = scalar_lea.sflag [#allocation3], 1
    %2513 = vsyncpa %s2512, 1
    %2514 = vsyncpa [#allocation4], 1
    %s2515 = scalar_lea.sflag [#allocation4], 1
    %2516 = vsyncpa %s2515, 1

</llo_original>
